<compile_context>
chip_gen: v6e
topology: v6e:2x2x1
jax: 0.10.0
libtpu: 0.0.40
codegen_flags: <defaults>
</compile_context>

<pallas_src>
import functools
import math

import jax
import jax.numpy as jnp
from jax.experimental import pallas as pl
from jax.experimental.pallas import tpu as pltpu

# ---- module hyper-parameters (small, consistent with the reference) ----
BATCH = 2
BLOCK_SIZE = 8             # sequence length / tril size
EMBEDDING_DIMENSIONS = 32  # c
NUMBER_HEADS = 4
HEAD_SIZE = EMBEDDING_DIMENSIONS // NUMBER_HEADS  # 8


def _mha_kernel(x_ref, wk_ref, wvp_ref, mask_ref, bp_ref, o_ref, *, batch, heads):
    """Whole problem in one invocation; everything batched over n = b*heads + h.

    x_ref   : (B*H, T, C)  bf16 -- x replicated per head (head-major leading axis)
    wk_ref  : (B*H, C, hs) bf16 -- key weights, scale c**-0.5 pre-folded (c**-0.25 per factor)
    wvp_ref : (B*H, C, C)  bf16 -- fused (value @ out-proj-slice) weights per head
    mask_ref: (T, T)       f32  -- additive causal bias (0 on/below diag, -1e30 above)
    bp_ref  : (1, C)       f32  -- out-proj bias
    o_ref   : (B, T, C)
    """
    x = x_ref[...]

    # Batched per-(batch, head) projections -- no per-head lane slicing needed.
    k = jnp.einsum("ntc,ncd->ntd", x, wk_ref[...],
                   preferred_element_type=jnp.float32)        # (B*H, T, hs)
    vp = jnp.einsum("ntc,ncd->ntd", x, wvp_ref[...],
                    preferred_element_type=jnp.float32)       # (B*H, T, C)

    # q == k (reference quirk); attention scale already folded into wk.
    s = jnp.einsum("ntd,nsd->nts", k, k,
                   preferred_element_type=jnp.float32)        # (B*H, T, T)
    s = s + mask_ref[...]                                     # causal additive bias

    # Numerically-stable softmax along keys, f32 throughout (EUP reciprocal).
    s = s - jnp.max(s, axis=-1, keepdims=True)
    e = jnp.exp(s)
    p = e * pl.reciprocal(jnp.sum(e, axis=-1, keepdims=True), approx=True)

    # P @ (V fused with its out-proj slice); heads then simply add.
    o = jnp.einsum("nts,nsc->ntc", p, vp,
                   preferred_element_type=jnp.float32)        # (B*H, T, C)
    n, t, c = o.shape
    o = o.reshape(batch, heads, t, c).sum(axis=1)             # (B, T, C)

    # TODO(synk): nn.Dropout(0.2) omitted (inference-mode identity).
    o_ref[...] = (o + bp_ref[...]).astype(o_ref.dtype)        # single full-ref store


@jax.jit
def multi_head_attention(x, wk, wv, wp_t, bp):
    """x: (B, T, C) f32; wk/wv: (H, C, hs) in `x @ W` layout; wp_t: (C, C); bp: (C,)."""
    b, t, c = x.shape
    h, _, hs = wk.shape

    # Attention scale c**-0.5 split evenly onto both K factors (valid: q == k).
    wk_s = wk * (c ** -0.25)                                           # (H, C, hs)

    # Fuse each head's value projection with its slice of the output projection:
    #   cat(head_h) @ wp_t == sum_h head_h @ wp_t[h*hs:(h+1)*hs, :]
    wvp = jnp.einsum("hcd,hde->hce", wv, wp_t.reshape(h, hs, c))       # (H, C, C)

    # Head-major stacking on a (B*H) leading axis; bf16 MXU operands only
    # (softmax / elementwise stay f32 inside the kernel).
    x_bh = jnp.broadcast_to(x[:, None], (b, h, t, c)).reshape(b * h, t, c)
    x_bh = x_bh.astype(jnp.bfloat16)
    wk_bh = jnp.broadcast_to(wk_s[None], (b, h, c, hs)).reshape(b * h, c, hs)
    wk_bh = wk_bh.astype(jnp.bfloat16)
    wvp_bh = jnp.broadcast_to(wvp[None], (b, h, c, c)).reshape(b * h, c, c)
    wvp_bh = wvp_bh.astype(jnp.bfloat16)

    # Additive causal mask (finite fill keeps softmax NaN-safe; diagonal always
    # unmasked, so post-softmax results match the -inf reference).
    row = jnp.arange(t)[:, None]
    col = jnp.arange(t)[None, :]
    mask_bias = jnp.where(row >= col, 0.0, -1e30).astype(jnp.float32)  # (T, T)

    bp2 = bp.reshape(1, c).astype(jnp.float32)

    kernel = functools.partial(_mha_kernel, batch=b, heads=h)
    return pl.pallas_call(
        kernel,
        out_shape=jax.ShapeDtypeStruct((b, t, c), x.dtype),
        in_specs=[pl.BlockSpec(memory_space=pltpu.MemorySpace.VMEM)] * 5,
        out_specs=pl.BlockSpec(memory_space=pltpu.MemorySpace.VMEM),
    )(x_bh, wk_bh, wvp_bh, mask_bias, bp2)


def _reference(x, wk, wv, wp_t, bp):
    """Pure-JAX reference mirroring the PyTorch forward (dropout = identity)."""
    b, t, c = x.shape
    scale = c ** (-0.5)
    tril = jnp.tril(jnp.ones((t, t), dtype=bool))
    outs = []
    for h in range(NUMBER_HEADS):
        k = x @ wk[h]
        q = k                      # reference quirk: q uses the key projection
        v = x @ wv[h]
        s = jnp.einsum("btd,bsd->bts", q, k) * scale
        s = jnp.where(tril, s, -jnp.inf)
        s = jax.nn.softmax(s, axis=-1)
        outs.append(jnp.einsum("bts,bsd->btd", s, v))
    cat = jnp.concatenate(outs, axis=-1)
    return cat @ wp_t + bp


if __name__ == "__main__":
    key = jax.random.PRNGKey(0)
    kx, kk, kv, kp, kb = jax.random.split(key, 5)

    C, H, HS, T, B = EMBEDDING_DIMENSIONS, NUMBER_HEADS, HEAD_SIZE, BLOCK_SIZE, BATCH

    x = jax.random.normal(kx, (B, T, C), dtype=jnp.float32)

    # Deterministic parameter init (nn.Linear-style uniform(-1/sqrt(in), 1/sqrt(in))),
    # stored pre-transposed: (H, C, hs) so that x @ W matches x @ W_torch.T.
    lim = 1.0 / math.sqrt(C)
    wk = jax.random.uniform(kk, (H, C, HS), jnp.float32, -lim, lim)
    wv = jax.random.uniform(kv, (H, C, HS), jnp.float32, -lim, lim)
    wp_t = jax.random.uniform(kp, (C, C), jnp.float32, -lim, lim)
    bp = jax.random.uniform(kb, (C,), jnp.float32, -lim, lim)

    out = multi_head_attention(x, wk, wv, wp_t, bp)
    out = jax.block_until_ready(out)

    ref = _reference(x, wk, wv, wp_t, bp)
    assert out.shape == (B, T, C)
    # Tolerance 1e-2: bf16 MXU operands + host-side weight folding +
    # pl.reciprocal(approx=True) in the softmax denominator change rounding.
    assert jnp.allclose(out, ref, atol=1e-2, rtol=1e-2)

    print("KERNEL_OK")
</pallas_src>

<mosaic_0001>
module attributes {stable_mosaic.version = 11 : i64} {
  func.func @_mha_kernel(%arg0: memref<8x8x32xbf16, #tpu.memory_space<vmem>>, %arg1: memref<8x32x8xbf16, #tpu.memory_space<vmem>>, %arg2: memref<8x32x32xbf16, #tpu.memory_space<vmem>>, %arg3: memref<8x8xf32, #tpu.memory_space<vmem>>, %arg4: memref<1x32xf32, #tpu.memory_space<vmem>>, %arg5: memref<2x8x32xf32, #tpu.memory_space<vmem>>) attributes {dimension_semantics = [], scalar_prefetch = 0 : i64, scratch_operands = 0 : i64, tpu.core_type = #tpu.core_type<tc>} {
    %c0 = arith.constant 0 : index
    %c0_0 = arith.constant 0 : index
    %c0_1 = arith.constant 0 : index
    %0 = vector.load %arg0[%c0, %c0_0, %c0_1] : memref<8x8x32xbf16, #tpu.memory_space<vmem>>, vector<8x8x32xbf16>
    %c0_2 = arith.constant 0 : index
    %c0_3 = arith.constant 0 : index
    %c0_4 = arith.constant 0 : index
    %1 = vector.load %arg1[%c0_2, %c0_3, %c0_4] : memref<8x32x8xbf16, #tpu.memory_space<vmem>>, vector<8x32x8xbf16>
    "tpu.trace_start"() <{level = 10 : i32, message = "ntc,ncd->ntd"}> : () -> ()
    %cst = arith.constant dense<0.000000e+00> : vector<8x8x8xf32>
    %2 = tpu.matmul %0, %1, %cst {dimension_numbers = #tpu.dot_dimension_numbers<[2], [1], [1], [2], [0, 0, 0, 1, 1, 2], [0], [0]>} : vector<8x8x32xbf16>, vector<8x32x8xbf16>, vector<8x8x8xf32> -> vector<8x8x8xf32>
    "tpu.trace_stop"() : () -> ()
    %c0_5 = arith.constant 0 : index
    %c0_6 = arith.constant 0 : index
    %c0_7 = arith.constant 0 : index
    %3 = vector.load %arg2[%c0_5, %c0_6, %c0_7] : memref<8x32x32xbf16, #tpu.memory_space<vmem>>, vector<8x32x32xbf16>
    "tpu.trace_start"() <{level = 10 : i32, message = "ntc,ncd->ntd"}> : () -> ()
    %cst_8 = arith.constant dense<0.000000e+00> : vector<8x8x32xf32>
    %4 = tpu.matmul %0, %3, %cst_8 {dimension_numbers = #tpu.dot_dimension_numbers<[2], [1], [1], [2], [0, 0, 0, 1, 1, 2], [0], [0]>} : vector<8x8x32xbf16>, vector<8x32x32xbf16>, vector<8x8x32xf32> -> vector<8x8x32xf32>
    "tpu.trace_stop"() : () -> ()
    "tpu.trace_start"() <{level = 10 : i32, message = "ntd,nsd->nts"}> : () -> ()
    %cst_9 = arith.constant dense<0.000000e+00> : vector<8x8x8xf32>
    %5 = tpu.matmul %2, %2, %cst_9 {dimension_numbers = #tpu.dot_dimension_numbers<[2], [2], [1], [1], [0, 0, 0, 1, 1, 1], [0], [0]>} : vector<8x8x8xf32>, vector<8x8x8xf32>, vector<8x8x8xf32> -> vector<8x8x8xf32>
    "tpu.trace_stop"() : () -> ()
    %c0_10 = arith.constant 0 : index
    %c0_11 = arith.constant 0 : index
    %6 = vector.load %arg3[%c0_10, %c0_11] : memref<8x8xf32, #tpu.memory_space<vmem>>, vector<8x8xf32>
    %7 = vector.shape_cast %6 : vector<8x8xf32> to vector<1x8x8xf32>
    %8 = vector.broadcast %7 : vector<1x8x8xf32> to vector<8x8x8xf32>
    %9 = arith.addf %5, %8 : vector<8x8x8xf32>
    %cst_12 = arith.constant dense<0xFF800000> : vector<8x8xf32>
    %10 = vector.multi_reduction <maximumf>, %9, %cst_12 [2] : vector<8x8x8xf32> to vector<8x8xf32>
    %11 = vector.shape_cast %10 : vector<8x8xf32> to vector<8x8x1xf32>
    %12 = vector.broadcast %11 : vector<8x8x1xf32> to vector<8x8x8xf32>
    %13 = arith.subf %9, %12 : vector<8x8x8xf32>
    %14 = math.exp %13 : vector<8x8x8xf32>
    %cst_13 = arith.constant dense<0.000000e+00> : vector<8x8xf32>
    %15 = vector.multi_reduction <add>, %14, %cst_13 [2] : vector<8x8x8xf32> to vector<8x8xf32>
    %16 = vector.shape_cast %15 : vector<8x8xf32> to vector<8x8x1xf32>
    %17 = tpu.reciprocal %16 {approx = true} : vector<8x8x1xf32> -> vector<8x8x1xf32>
    %18 = vector.broadcast %17 : vector<8x8x1xf32> to vector<8x8x8xf32>
    %19 = arith.mulf %14, %18 : vector<8x8x8xf32>
    "tpu.trace_start"() <{level = 10 : i32, message = "nts,nsc->ntc"}> : () -> ()
    %cst_14 = arith.constant dense<0.000000e+00> : vector<8x8x32xf32>
    %20 = tpu.matmul %19, %4, %cst_14 {dimension_numbers = #tpu.dot_dimension_numbers<[2], [1], [1], [2], [0, 0, 0, 1, 1, 2], [0], [0]>} : vector<8x8x8xf32>, vector<8x8x32xf32>, vector<8x8x32xf32> -> vector<8x8x32xf32>
    "tpu.trace_stop"() : () -> ()
    %21 = vector.shape_cast %20 : vector<8x8x32xf32> to vector<2x4x8x32xf32>
    %cst_15 = arith.constant dense<0.000000e+00> : vector<2x8x32xf32>
    %22 = vector.multi_reduction <add>, %21, %cst_15 [1] : vector<2x4x8x32xf32> to vector<2x8x32xf32>
    %c0_16 = arith.constant 0 : index
    %c0_17 = arith.constant 0 : index
    %23 = vector.load %arg4[%c0_16, %c0_17] : memref<1x32xf32, #tpu.memory_space<vmem>>, vector<1x32xf32>
    %24 = vector.shape_cast %23 : vector<1x32xf32> to vector<1x1x32xf32>
    %25 = vector.broadcast %24 : vector<1x1x32xf32> to vector<2x8x32xf32>
    %26 = arith.addf %22, %25 : vector<2x8x32xf32>
    %c0_18 = arith.constant 0 : index
    %c0_19 = arith.constant 0 : index
    %c0_20 = arith.constant 0 : index
    %27 = vector.load %arg5[%c0_18, %c0_19, %c0_20] : memref<2x8x32xf32, #tpu.memory_space<vmem>>, vector<2x8x32xf32>
    tpu.vector_store %arg5[%c0_18, %c0_19, %c0_20], %26 {strides = array<i32>} : memref<2x8x32xf32, #tpu.memory_space<vmem>>, vector<2x8x32xf32>,
    return
  }
}

</mosaic_0001>

<llo_original>
// kernel: multi_head_attention.1
$region0: #{multi_head_attention.1}
  #allocation0 [shape = 'u32[]', space=smem, size = 0x4, offset = 0x4, fixed_abs, tag = 'smem constant byte address 0x4 - core index']
  #allocation1 [shape = 'u32[144,128]{1,0:T(1,128)}', space=vmem, size = 0x12000, scoped, tag = 'internal scratch']
  %s0 = inlined_call_operand.vmem [shape: bf16[8,8,32], index: 0, kind: input, shape index: {}]
  %s1 = inlined_call_operand.vmem [shape: bf16[8,32,8], index: 1, kind: input, shape index: {}]
  %s2 = inlined_call_operand.vmem [shape: bf16[8,32,32], index: 2, kind: input, shape index: {}]
  %s3 = inlined_call_operand.vmem [shape: f32[8,8], index: 3, kind: input, shape index: {}]
  %s4 = inlined_call_operand.vmem [shape: f32[1,32], index: 4, kind: input, shape index: {}]
  %s5 = inlined_call_operand.hbm [shape: f32[2,8,32], index: 5, kind: output, shape index: {}]
  %s6 = sld [smem:[#allocation0]]
  $region30: #{multi_head_attention.1} parent=0
    _
  %s8 = ssub.s32 1, %s6
  %s9 = scalar_select 0, %s8, %s6
  $region1: #{multi_head_attention.1} parent=0
    #allocation2 [shape = 'u8[8192]{0}', space=vmem, size = 0x2000, scoped, tag = 'output window, operand 0, single buffered']
    #allocation3 [shape = 's32[1]{0}', space=sflag, size = 0x4, scoped, tag = 'scoped memory for multi_head_attention.1']
    %10 = vsyncpa [#allocation3], 0
    // Predicated region
    $region2: #{multi_head_attention.1} parent=1 // pred_check
      _
    $region3: #{multi_head_attention.1} parent=1 // pred_check_branch
      %12 = sbr.rel (0) target = $region5
    $region4: #{multi_head_attention.1} parent=1 // pred_region
      _
    $region5: #{multi_head_attention.1} parent=1 // pred_fallthru
      _
    // Predicated region
    $region6: #{multi_head_attention.1} parent=1 // pred_check
      _
    $region7: #{multi_head_attention.1} parent=1 // pred_check_branch
      %14 = sbr.rel (0) target = $region9
    $region8: #{multi_head_attention.1} parent=1 // pred_region
      _
    $region9: #{multi_head_attention.1} parent=1 // pred_fallthru
      _
    // Predicated region
    $region10: #{multi_head_attention.1} parent=1 // pred_check
      _
    $region11: #{multi_head_attention.1} parent=1 // pred_check_branch
      %16 = sbr.rel (0) target = $region13
    $region12: #{multi_head_attention.1} parent=1 // pred_region
      _
    $region13: #{multi_head_attention.1} parent=1 // pred_fallthru
      _
    // Predicated region
    $region14: #{multi_head_attention.1} parent=1 // pred_check
      _
    $region15: #{multi_head_attention.1} parent=1 // pred_check_branch
      %18 = sbr.rel (0) target = $region17
    $region16: #{multi_head_attention.1} parent=1 // pred_region
      _
    $region17: #{multi_head_attention.1} parent=1 // pred_fallthru
      _
    // Predicated region
    $region18: #{multi_head_attention.1} parent=1 // pred_check
      _
    $region19: #{multi_head_attention.1} parent=1 // pred_check_branch
      %20 = sbr.rel (0) target = $region21
    $region20: #{multi_head_attention.1} parent=1 // pred_region
      _
    $region21: #{multi_head_attention.1} parent=1 // pred_fallthru
      _
    %v22 = vld [vmem:[%s0] sm:$0xf]
    %v23 = vld [vmem:[%s0 + $0x4] sm:$0xf]
    %v24 = vld [vmem:[%s0 + $0x8] sm:$0xf]
    %v25 = vld [vmem:[%s0 + $0xc] sm:$0xf]
    %v26 = vld [vmem:[%s0 + $0x10] sm:$0xf]
    %v27 = vld [vmem:[%s0 + $0x14] sm:$0xf]
    %v28 = vld [vmem:[%s0 + $0x18] sm:$0xf]
    %v29 = vld [vmem:[%s0 + $0x1c] sm:$0xf]
    %v30 = vld [vmem:[%s1] sm:$0xf]
    %v31 = vld [vmem:[%s1 + $0x4] sm:$0xf]
    %v32 = vld [vmem:[%s1 + $0x8] sm:$0xf]
    %v33 = vld [vmem:[%s1 + $0xc] sm:$0xf]
    %v34 = vld [vmem:[%s1 + $0x10] sm:$0xf]
    %v35 = vld [vmem:[%s1 + $0x14] sm:$0xf]
    %v36 = vld [vmem:[%s1 + $0x18] sm:$0xf]
    %v37 = vld [vmem:[%s1 + $0x1c] sm:$0xf]
    %v38 = vld [vmem:[%s1 + $0x20] sm:$0xf]
    %v39 = vld [vmem:[%s1 + $0x24] sm:$0xf]
    %v40 = vld [vmem:[%s1 + $0x28] sm:$0xf]
    %v41 = vld [vmem:[%s1 + $0x2c] sm:$0xf]
    %v42 = vld [vmem:[%s1 + $0x30] sm:$0xf]
    %v43 = vld [vmem:[%s1 + $0x34] sm:$0xf]
    %v44 = vld [vmem:[%s1 + $0x38] sm:$0xf]
    %v45 = vld [vmem:[%s1 + $0x3c] sm:$0xf]
    %v46 = vld [vmem:[%s1 + $0x40] sm:$0xf]
    %v47 = vld [vmem:[%s1 + $0x44] sm:$0xf]
    %v48 = vld [vmem:[%s1 + $0x48] sm:$0xf]
    %v49 = vld [vmem:[%s1 + $0x4c] sm:$0xf]
    %v50 = vld [vmem:[%s1 + $0x50] sm:$0xf]
    %v51 = vld [vmem:[%s1 + $0x54] sm:$0xf]
    %v52 = vld [vmem:[%s1 + $0x58] sm:$0xf]
    %v53 = vld [vmem:[%s1 + $0x5c] sm:$0xf]
    %v54 = vld [vmem:[%s1 + $0x60] sm:$0xf]
    %v55 = vld [vmem:[%s1 + $0x64] sm:$0xf]
    %v56 = vld [vmem:[%s1 + $0x68] sm:$0xf]
    %v57 = vld [vmem:[%s1 + $0x6c] sm:$0xf]
    %v58 = vld [vmem:[%s1 + $0x70] sm:$0xf]
    %v59 = vld [vmem:[%s1 + $0x74] sm:$0xf]
    %v60 = vld [vmem:[%s1 + $0x78] sm:$0xf]
    %v61 = vld [vmem:[%s1 + $0x7c] sm:$0xf]
    %v66 = vunpack.c.l.b16 %v30
    %v67 = vunpack.c.l.b16 %v31
    %v68 = vunpack.c.l.b16 %v32
    %v69 = vunpack.c.l.b16 %v33
    %v70 = vpack.c.b16 %v67, %v66
    %v71 = vpack.c.b16 %v69, %v68
    %vm74 = vcmask 261120
    %v76 = vsel %vm74, %v22, 0
    %78 = vmatprep.subr.bf16.mxu0 0
    %79 = vmatpush1.bf16.msra.mxu0 0
    %80 = vmatprep.subr.bf16.mxu0 0
    %81 = vmatpush1.bf16.msra.mxu0 0
    %82 = vmatprep.subr.bf16.mxu0 0
    %83 = vmatpush1.bf16.msra.mxu0 0
    %84 = vmatprep.subr.bf16.mxu0 0
    %85 = vmatpush1.bf16.msra.mxu0 0
    %86 = vmatprep.subr.bf16.mxu0 0
    %87 = vmatpush1.bf16.msra.mxu0 0
    %88 = vmatprep.subr.bf16.mxu0 0
    %89 = vmatpush1.bf16.msra.mxu0 0
    %90 = vmatprep.subr.bf16.mxu0 0
    %91 = vmatpush1.bf16.msra.mxu0 %v71
    %92 = vmatprep.subr.bf16.mxu0 0
    %93 = vmatpush1.bf16.msra.mxu0 %v70
    %94 = vmatprep.subr.bf16.mxu0 0
    %95 = vmatpush2.bf16.msra.mxu0 0
    %96 = vmatprep.subr.bf16.mxu0 0
    %97 = vmatpush2.bf16.msra.mxu0 0
    %98 = vmatprep.subr.bf16.mxu0 0
    %99 = vmatpush2.bf16.msra.mxu0 0
    %100 = vmatprep.subr.bf16.mxu0 0
    %101 = vmatpush2.bf16.msra.mxu0 0
    %102 = vmatprep.subr.bf16.mxu0 0
    %103 = vmatpush2.bf16.msra.mxu0 0
    %104 = vmatprep.subr.bf16.mxu0 0
    %105 = vmatpush2.bf16.msra.mxu0 0
    %106 = vmatprep.subr.bf16.mxu0 0
    %107 = vmatpush2.bf16.msra.mxu0 0
    %108 = vmatprep.subr.bf16.mxu0 0
    %109 = vmatpush2.bf16.msra.mxu0 0
    %110 = vmatprep.mubr.bf16.mxu0 0
    %111 = vmatmul.mubr.bf16.gmra.mxu0 %v76
    %v112 = vpop.f32.mrf.mxu0
    %v113 = vadd.f32 0.0, %v112
    %v114 = vpop.f32.mrf.mxu0
    %v115 = vpop.f32.mrf.mxu0
    %v116 = vpop.f32.mrf.mxu0
    %117 = vdwg.mxu0
    %v122 = vunpack.c.l.b16 %v34
    %v123 = vunpack.c.l.b16 %v35
    %v124 = vunpack.c.l.b16 %v36
    %v125 = vunpack.c.l.b16 %v37
    %v126 = vpack.c.b16 %v123, %v122
    %v127 = vpack.c.b16 %v125, %v124
    %v131 = vsel %vm74, %v23, 0
    %133 = vmatprep.subr.bf16.mxu0 0
    %134 = vmatpush1.bf16.msra.mxu0 0
    %135 = vmatprep.subr.bf16.mxu0 0
    %136 = vmatpush1.bf16.msra.mxu0 0
    %137 = vmatprep.subr.bf16.mxu0 0
    %138 = vmatpush1.bf16.msra.mxu0 0
    %139 = vmatprep.subr.bf16.mxu0 0
    %140 = vmatpush1.bf16.msra.mxu0 0
    %141 = vmatprep.subr.bf16.mxu0 0
    %142 = vmatpush1.bf16.msra.mxu0 0
    %143 = vmatprep.subr.bf16.mxu0 0
    %144 = vmatpush1.bf16.msra.mxu0 0
    %145 = vmatprep.subr.bf16.mxu0 0
    %146 = vmatpush1.bf16.msra.mxu0 %v127
    %147 = vmatprep.subr.bf16.mxu0 0
    %148 = vmatpush1.bf16.msra.mxu0 %v126
    %149 = vmatprep.subr.bf16.mxu0 0
    %150 = vmatpush2.bf16.msra.mxu0 0
    %151 = vmatprep.subr.bf16.mxu0 0
    %152 = vmatpush2.bf16.msra.mxu0 0
    %153 = vmatprep.subr.bf16.mxu0 0
    %154 = vmatpush2.bf16.msra.mxu0 0
    %155 = vmatprep.subr.bf16.mxu0 0
    %156 = vmatpush2.bf16.msra.mxu0 0
    %157 = vmatprep.subr.bf16.mxu0 0
    %158 = vmatpush2.bf16.msra.mxu0 0
    %159 = vmatprep.subr.bf16.mxu0 0
    %160 = vmatpush2.bf16.msra.mxu0 0
    %161 = vmatprep.subr.bf16.mxu0 0
    %162 = vmatpush2.bf16.msra.mxu0 0
    %163 = vmatprep.subr.bf16.mxu0 0
    %164 = vmatpush2.bf16.msra.mxu0 0
    %165 = vmatprep.mubr.bf16.mxu0 0
    %166 = vmatmul.mubr.bf16.gmra.mxu0 %v131
    %v167 = vpop.f32.mrf.mxu0
    %v168 = vadd.f32 0.0, %v167
    %v169 = vpop.f32.mrf.mxu0
    %v170 = vpop.f32.mrf.mxu0
    %v171 = vpop.f32.mrf.mxu0
    %172 = vdwg.mxu0
    %v177 = vunpack.c.l.b16 %v38
    %v178 = vunpack.c.l.b16 %v39
    %v179 = vunpack.c.l.b16 %v40
    %v180 = vunpack.c.l.b16 %v41
    %v181 = vpack.c.b16 %v178, %v177
    %v182 = vpack.c.b16 %v180, %v179
    %v186 = vsel %vm74, %v24, 0
    %188 = vmatprep.subr.bf16.mxu0 0
    %189 = vmatpush1.bf16.msra.mxu0 0
    %190 = vmatprep.subr.bf16.mxu0 0
    %191 = vmatpush1.bf16.msra.mxu0 0
    %192 = vmatprep.subr.bf16.mxu0 0
    %193 = vmatpush1.bf16.msra.mxu0 0
    %194 = vmatprep.subr.bf16.mxu0 0
    %195 = vmatpush1.bf16.msra.mxu0 0
    %196 = vmatprep.subr.bf16.mxu0 0
    %197 = vmatpush1.bf16.msra.mxu0 0
    %198 = vmatprep.subr.bf16.mxu0 0
    %199 = vmatpush1.bf16.msra.mxu0 0
    %200 = vmatprep.subr.bf16.mxu0 0
    %201 = vmatpush1.bf16.msra.mxu0 %v182
    %202 = vmatprep.subr.bf16.mxu0 0
    %203 = vmatpush1.bf16.msra.mxu0 %v181
    %204 = vmatprep.subr.bf16.mxu0 0
    %205 = vmatpush2.bf16.msra.mxu0 0
    %206 = vmatprep.subr.bf16.mxu0 0
    %207 = vmatpush2.bf16.msra.mxu0 0
    %208 = vmatprep.subr.bf16.mxu0 0
    %209 = vmatpush2.bf16.msra.mxu0 0
    %210 = vmatprep.subr.bf16.mxu0 0
    %211 = vmatpush2.bf16.msra.mxu0 0
    %212 = vmatprep.subr.bf16.mxu0 0
    %213 = vmatpush2.bf16.msra.mxu0 0
    %214 = vmatprep.subr.bf16.mxu0 0
    %215 = vmatpush2.bf16.msra.mxu0 0
    %216 = vmatprep.subr.bf16.mxu0 0
    %217 = vmatpush2.bf16.msra.mxu0 0
    %218 = vmatprep.subr.bf16.mxu0 0
    %219 = vmatpush2.bf16.msra.mxu0 0
    %220 = vmatprep.mubr.bf16.mxu0 0
    %221 = vmatmul.mubr.bf16.gmra.mxu0 %v186
    %v222 = vpop.f32.mrf.mxu0
    %v223 = vadd.f32 0.0, %v222
    %v224 = vpop.f32.mrf.mxu0
    %v225 = vpop.f32.mrf.mxu0
    %v226 = vpop.f32.mrf.mxu0
    %227 = vdwg.mxu0
    %v232 = vunpack.c.l.b16 %v42
    %v233 = vunpack.c.l.b16 %v43
    %v234 = vunpack.c.l.b16 %v44
    %v235 = vunpack.c.l.b16 %v45
    %v236 = vpack.c.b16 %v233, %v232
    %v237 = vpack.c.b16 %v235, %v234
    %v241 = vsel %vm74, %v25, 0
    %243 = vmatprep.subr.bf16.mxu0 0
    %244 = vmatpush1.bf16.msra.mxu0 0
    %245 = vmatprep.subr.bf16.mxu0 0
    %246 = vmatpush1.bf16.msra.mxu0 0
    %247 = vmatprep.subr.bf16.mxu0 0
    %248 = vmatpush1.bf16.msra.mxu0 0
    %249 = vmatprep.subr.bf16.mxu0 0
    %250 = vmatpush1.bf16.msra.mxu0 0
    %251 = vmatprep.subr.bf16.mxu0 0
    %252 = vmatpush1.bf16.msra.mxu0 0
    %253 = vmatprep.subr.bf16.mxu0 0
    %254 = vmatpush1.bf16.msra.mxu0 0
    %255 = vmatprep.subr.bf16.mxu0 0
    %256 = vmatpush1.bf16.msra.mxu0 %v237
    %257 = vmatprep.subr.bf16.mxu0 0
    %258 = vmatpush1.bf16.msra.mxu0 %v236
    %259 = vmatprep.subr.bf16.mxu0 0
    %260 = vmatpush2.bf16.msra.mxu0 0
    %261 = vmatprep.subr.bf16.mxu0 0
    %262 = vmatpush2.bf16.msra.mxu0 0
    %263 = vmatprep.subr.bf16.mxu0 0
    %264 = vmatpush2.bf16.msra.mxu0 0
    %265 = vmatprep.subr.bf16.mxu0 0
    %266 = vmatpush2.bf16.msra.mxu0 0
    %267 = vmatprep.subr.bf16.mxu0 0
    %268 = vmatpush2.bf16.msra.mxu0 0
    %269 = vmatprep.subr.bf16.mxu0 0
    %270 = vmatpush2.bf16.msra.mxu0 0
    %271 = vmatprep.subr.bf16.mxu0 0
    %272 = vmatpush2.bf16.msra.mxu0 0
    %273 = vmatprep.subr.bf16.mxu0 0
    %274 = vmatpush2.bf16.msra.mxu0 0
    %275 = vmatprep.mubr.bf16.mxu0 0
    %276 = vmatmul.mubr.bf16.gmra.mxu0 %v241
    %v277 = vpop.f32.mrf.mxu0
    %v278 = vadd.f32 0.0, %v277
    %v279 = vpop.f32.mrf.mxu0
    %v280 = vpop.f32.mrf.mxu0
    %v281 = vpop.f32.mrf.mxu0
    %282 = vdwg.mxu0
    %v287 = vunpack.c.l.b16 %v46
    %v288 = vunpack.c.l.b16 %v47
    %v289 = vunpack.c.l.b16 %v48
    %v290 = vunpack.c.l.b16 %v49
    %v291 = vpack.c.b16 %v288, %v287
    %v292 = vpack.c.b16 %v290, %v289
    %v296 = vsel %vm74, %v26, 0
    %298 = vmatprep.subr.bf16.mxu0 0
    %299 = vmatpush1.bf16.msra.mxu0 0
    %300 = vmatprep.subr.bf16.mxu0 0
    %301 = vmatpush1.bf16.msra.mxu0 0
    %302 = vmatprep.subr.bf16.mxu0 0
    %303 = vmatpush1.bf16.msra.mxu0 0
    %304 = vmatprep.subr.bf16.mxu0 0
    %305 = vmatpush1.bf16.msra.mxu0 0
    %306 = vmatprep.subr.bf16.mxu0 0
    %307 = vmatpush1.bf16.msra.mxu0 0
    %308 = vmatprep.subr.bf16.mxu0 0
    %309 = vmatpush1.bf16.msra.mxu0 0
    %310 = vmatprep.subr.bf16.mxu0 0
    %311 = vmatpush1.bf16.msra.mxu0 %v292
    %312 = vmatprep.subr.bf16.mxu0 0
    %313 = vmatpush1.bf16.msra.mxu0 %v291
    %314 = vmatprep.subr.bf16.mxu0 0
    %315 = vmatpush2.bf16.msra.mxu0 0
    %316 = vmatprep.subr.bf16.mxu0 0
    %317 = vmatpush2.bf16.msra.mxu0 0
    %318 = vmatprep.subr.bf16.mxu0 0
    %319 = vmatpush2.bf16.msra.mxu0 0
    %320 = vmatprep.subr.bf16.mxu0 0
    %321 = vmatpush2.bf16.msra.mxu0 0
    %322 = vmatprep.subr.bf16.mxu0 0
    %323 = vmatpush2.bf16.msra.mxu0 0
    %324 = vmatprep.subr.bf16.mxu0 0
    %325 = vmatpush2.bf16.msra.mxu0 0
    %326 = vmatprep.subr.bf16.mxu0 0
    %327 = vmatpush2.bf16.msra.mxu0 0
    %328 = vmatprep.subr.bf16.mxu0 0
    %329 = vmatpush2.bf16.msra.mxu0 0
    %330 = vmatprep.mubr.bf16.mxu0 0
    %331 = vmatmul.mubr.bf16.gmra.mxu0 %v296
    %v332 = vpop.f32.mrf.mxu0
    %v333 = vadd.f32 0.0, %v332
    %v334 = vpop.f32.mrf.mxu0
    %v335 = vpop.f32.mrf.mxu0
    %v336 = vpop.f32.mrf.mxu0
    %337 = vdwg.mxu0
    %v342 = vunpack.c.l.b16 %v50
    %v343 = vunpack.c.l.b16 %v51
    %v344 = vunpack.c.l.b16 %v52
    %v345 = vunpack.c.l.b16 %v53
    %v346 = vpack.c.b16 %v343, %v342
    %v347 = vpack.c.b16 %v345, %v344
    %v351 = vsel %vm74, %v27, 0
    %353 = vmatprep.subr.bf16.mxu0 0
    %354 = vmatpush1.bf16.msra.mxu0 0
    %355 = vmatprep.subr.bf16.mxu0 0
    %356 = vmatpush1.bf16.msra.mxu0 0
    %357 = vmatprep.subr.bf16.mxu0 0
    %358 = vmatpush1.bf16.msra.mxu0 0
    %359 = vmatprep.subr.bf16.mxu0 0
    %360 = vmatpush1.bf16.msra.mxu0 0
    %361 = vmatprep.subr.bf16.mxu0 0
    %362 = vmatpush1.bf16.msra.mxu0 0
    %363 = vmatprep.subr.bf16.mxu0 0
    %364 = vmatpush1.bf16.msra.mxu0 0
    %365 = vmatprep.subr.bf16.mxu0 0
    %366 = vmatpush1.bf16.msra.mxu0 %v347
    %367 = vmatprep.subr.bf16.mxu0 0
    %368 = vmatpush1.bf16.msra.mxu0 %v346
    %369 = vmatprep.subr.bf16.mxu0 0
    %370 = vmatpush2.bf16.msra.mxu0 0
    %371 = vmatprep.subr.bf16.mxu0 0
    %372 = vmatpush2.bf16.msra.mxu0 0
    %373 = vmatprep.subr.bf16.mxu0 0
    %374 = vmatpush2.bf16.msra.mxu0 0
    %375 = vmatprep.subr.bf16.mxu0 0
    %376 = vmatpush2.bf16.msra.mxu0 0
    %377 = vmatprep.subr.bf16.mxu0 0
    %378 = vmatpush2.bf16.msra.mxu0 0
    %379 = vmatprep.subr.bf16.mxu0 0
    %380 = vmatpush2.bf16.msra.mxu0 0
    %381 = vmatprep.subr.bf16.mxu0 0
    %382 = vmatpush2.bf16.msra.mxu0 0
    %383 = vmatprep.subr.bf16.mxu0 0
    %384 = vmatpush2.bf16.msra.mxu0 0
    %385 = vmatprep.mubr.bf16.mxu0 0
    %386 = vmatmul.mubr.bf16.gmra.mxu0 %v351
    %v387 = vpop.f32.mrf.mxu0
    %v388 = vadd.f32 0.0, %v387
    %v389 = vpop.f32.mrf.mxu0
    %v390 = vpop.f32.mrf.mxu0
    %v391 = vpop.f32.mrf.mxu0
    %392 = vdwg.mxu0
    %v397 = vunpack.c.l.b16 %v54
    %v398 = vunpack.c.l.b16 %v55
    %v399 = vunpack.c.l.b16 %v56
    %v400 = vunpack.c.l.b16 %v57
    %v401 = vpack.c.b16 %v398, %v397
    %v402 = vpack.c.b16 %v400, %v399
    %v406 = vsel %vm74, %v28, 0
    %408 = vmatprep.subr.bf16.mxu0 0
    %409 = vmatpush1.bf16.msra.mxu0 0
    %410 = vmatprep.subr.bf16.mxu0 0
    %411 = vmatpush1.bf16.msra.mxu0 0
    %412 = vmatprep.subr.bf16.mxu0 0
    %413 = vmatpush1.bf16.msra.mxu0 0
    %414 = vmatprep.subr.bf16.mxu0 0
    %415 = vmatpush1.bf16.msra.mxu0 0
    %416 = vmatprep.subr.bf16.mxu0 0
    %417 = vmatpush1.bf16.msra.mxu0 0
    %418 = vmatprep.subr.bf16.mxu0 0
    %419 = vmatpush1.bf16.msra.mxu0 0
    %420 = vmatprep.subr.bf16.mxu0 0
    %421 = vmatpush1.bf16.msra.mxu0 %v402
    %422 = vmatprep.subr.bf16.mxu0 0
    %423 = vmatpush1.bf16.msra.mxu0 %v401
    %424 = vmatprep.subr.bf16.mxu0 0
    %425 = vmatpush2.bf16.msra.mxu0 0
    %426 = vmatprep.subr.bf16.mxu0 0
    %427 = vmatpush2.bf16.msra.mxu0 0
    %428 = vmatprep.subr.bf16.mxu0 0
    %429 = vmatpush2.bf16.msra.mxu0 0
    %430 = vmatprep.subr.bf16.mxu0 0
    %431 = vmatpush2.bf16.msra.mxu0 0
    %432 = vmatprep.subr.bf16.mxu0 0
    %433 = vmatpush2.bf16.msra.mxu0 0
    %434 = vmatprep.subr.bf16.mxu0 0
    %435 = vmatpush2.bf16.msra.mxu0 0
    %436 = vmatprep.subr.bf16.mxu0 0
    %437 = vmatpush2.bf16.msra.mxu0 0
    %438 = vmatprep.subr.bf16.mxu0 0
    %439 = vmatpush2.bf16.msra.mxu0 0
    %440 = vmatprep.mubr.bf16.mxu0 0
    %441 = vmatmul.mubr.bf16.gmra.mxu0 %v406
    %v442 = vpop.f32.mrf.mxu0
    %v443 = vadd.f32 0.0, %v442
    %v444 = vpop.f32.mrf.mxu0
    %v445 = vpop.f32.mrf.mxu0
    %v446 = vpop.f32.mrf.mxu0
    %447 = vdwg.mxu0
    %v452 = vunpack.c.l.b16 %v58
    %v453 = vunpack.c.l.b16 %v59
    %v454 = vunpack.c.l.b16 %v60
    %v455 = vunpack.c.l.b16 %v61
    %v456 = vpack.c.b16 %v453, %v452
    %v457 = vpack.c.b16 %v455, %v454
    %v461 = vsel %vm74, %v29, 0
    %463 = vmatprep.subr.bf16.mxu0 0
    %464 = vmatpush1.bf16.msra.mxu0 0
    %465 = vmatprep.subr.bf16.mxu0 0
    %466 = vmatpush1.bf16.msra.mxu0 0
    %467 = vmatprep.subr.bf16.mxu0 0
    %468 = vmatpush1.bf16.msra.mxu0 0
    %469 = vmatprep.subr.bf16.mxu0 0
    %470 = vmatpush1.bf16.msra.mxu0 0
    %471 = vmatprep.subr.bf16.mxu0 0
    %472 = vmatpush1.bf16.msra.mxu0 0
    %473 = vmatprep.subr.bf16.mxu0 0
    %474 = vmatpush1.bf16.msra.mxu0 0
    %475 = vmatprep.subr.bf16.mxu0 0
    %476 = vmatpush1.bf16.msra.mxu0 %v457
    %477 = vmatprep.subr.bf16.mxu0 0
    %478 = vmatpush1.bf16.msra.mxu0 %v456
    %479 = vmatprep.subr.bf16.mxu0 0
    %480 = vmatpush2.bf16.msra.mxu0 0
    %481 = vmatprep.subr.bf16.mxu0 0
    %482 = vmatpush2.bf16.msra.mxu0 0
    %483 = vmatprep.subr.bf16.mxu0 0
    %484 = vmatpush2.bf16.msra.mxu0 0
    %485 = vmatprep.subr.bf16.mxu0 0
    %486 = vmatpush2.bf16.msra.mxu0 0
    %487 = vmatprep.subr.bf16.mxu0 0
    %488 = vmatpush2.bf16.msra.mxu0 0
    %489 = vmatprep.subr.bf16.mxu0 0
    %490 = vmatpush2.bf16.msra.mxu0 0
    %491 = vmatprep.subr.bf16.mxu0 0
    %492 = vmatpush2.bf16.msra.mxu0 0
    %493 = vmatprep.subr.bf16.mxu0 0
    %494 = vmatpush2.bf16.msra.mxu0 0
    %495 = vmatprep.mubr.bf16.mxu0 0
    %496 = vmatmul.mubr.bf16.gmra.mxu0 %v461
    %v497 = vpop.f32.mrf.mxu0
    %v498 = vadd.f32 0.0, %v497
    %v499 = vpop.f32.mrf.mxu0
    %v500 = vpop.f32.mrf.mxu0
    %v501 = vpop.f32.mrf.mxu0
    %502 = vdwg.mxu0
    %v503 = vld [vmem:[%s2] sm:$0xf]
    %v504 = vld [vmem:[%s2 + $0x4] sm:$0xf]
    %v505 = vld [vmem:[%s2 + $0x8] sm:$0xf]
    %v506 = vld [vmem:[%s2 + $0xc] sm:$0xf]
    %v507 = vld [vmem:[%s2 + $0x10] sm:$0xf]
    %v508 = vld [vmem:[%s2 + $0x14] sm:$0xf]
    %v509 = vld [vmem:[%s2 + $0x18] sm:$0xf]
    %v510 = vld [vmem:[%s2 + $0x1c] sm:$0xf]
    %v511 = vld [vmem:[%s2 + $0x20] sm:$0xf]
    %v512 = vld [vmem:[%s2 + $0x24] sm:$0xf]
    %v513 = vld [vmem:[%s2 + $0x28] sm:$0xf]
    %v514 = vld [vmem:[%s2 + $0x2c] sm:$0xf]
    %v515 = vld [vmem:[%s2 + $0x30] sm:$0xf]
    %v516 = vld [vmem:[%s2 + $0x34] sm:$0xf]
    %v517 = vld [vmem:[%s2 + $0x38] sm:$0xf]
    %v518 = vld [vmem:[%s2 + $0x3c] sm:$0xf]
    %v519 = vld [vmem:[%s2 + $0x40] sm:$0xf]
    %v520 = vld [vmem:[%s2 + $0x44] sm:$0xf]
    %v521 = vld [vmem:[%s2 + $0x48] sm:$0xf]
    %v522 = vld [vmem:[%s2 + $0x4c] sm:$0xf]
    %v523 = vld [vmem:[%s2 + $0x50] sm:$0xf]
    %v524 = vld [vmem:[%s2 + $0x54] sm:$0xf]
    %v525 = vld [vmem:[%s2 + $0x58] sm:$0xf]
    %v526 = vld [vmem:[%s2 + $0x5c] sm:$0xf]
    %v527 = vld [vmem:[%s2 + $0x60] sm:$0xf]
    %v528 = vld [vmem:[%s2 + $0x64] sm:$0xf]
    %v529 = vld [vmem:[%s2 + $0x68] sm:$0xf]
    %v530 = vld [vmem:[%s2 + $0x6c] sm:$0xf]
    %v531 = vld [vmem:[%s2 + $0x70] sm:$0xf]
    %v532 = vld [vmem:[%s2 + $0x74] sm:$0xf]
    %v533 = vld [vmem:[%s2 + $0x78] sm:$0xf]
    %v534 = vld [vmem:[%s2 + $0x7c] sm:$0xf]
    %v539 = vunpack.c.l.b16 %v503
    %v540 = vunpack.c.l.b16 %v504
    %v541 = vunpack.c.l.b16 %v505
    %v542 = vunpack.c.l.b16 %v506
    %v543 = vpack.c.b16 %v540, %v539
    %v544 = vpack.c.b16 %v542, %v541
    %547 = vmatprep.subr.bf16.mxu0 0
    %548 = vmatpush1.bf16.msra.mxu0 0
    %549 = vmatprep.subr.bf16.mxu0 0
    %550 = vmatpush1.bf16.msra.mxu0 0
    %551 = vmatprep.subr.bf16.mxu0 0
    %552 = vmatpush1.bf16.msra.mxu0 0
    %553 = vmatprep.subr.bf16.mxu0 0
    %554 = vmatpush1.bf16.msra.mxu0 0
    %555 = vmatprep.subr.bf16.mxu0 0
    %556 = vmatpush1.bf16.msra.mxu0 0
    %557 = vmatprep.subr.bf16.mxu0 0
    %558 = vmatpush1.bf16.msra.mxu0 0
    %559 = vmatprep.subr.bf16.mxu0 0
    %560 = vmatpush1.bf16.msra.mxu0 %v544
    %561 = vmatprep.subr.bf16.mxu0 0
    %562 = vmatpush1.bf16.msra.mxu0 %v543
    %563 = vmatprep.subr.bf16.mxu0 0
    %564 = vmatpush2.bf16.msra.mxu0 0
    %565 = vmatprep.subr.bf16.mxu0 0
    %566 = vmatpush2.bf16.msra.mxu0 0
    %567 = vmatprep.subr.bf16.mxu0 0
    %568 = vmatpush2.bf16.msra.mxu0 0
    %569 = vmatprep.subr.bf16.mxu0 0
    %570 = vmatpush2.bf16.msra.mxu0 0
    %571 = vmatprep.subr.bf16.mxu0 0
    %572 = vmatpush2.bf16.msra.mxu0 0
    %573 = vmatprep.subr.bf16.mxu0 0
    %574 = vmatpush2.bf16.msra.mxu0 0
    %575 = vmatprep.subr.bf16.mxu0 0
    %576 = vmatpush2.bf16.msra.mxu0 0
    %577 = vmatprep.subr.bf16.mxu0 0
    %578 = vmatpush2.bf16.msra.mxu0 0
    %579 = vmatprep.mubr.bf16.mxu0 0
    %580 = vmatmul.mubr.bf16.gmra.mxu0 %v76
    %v581 = vpop.f32.mrf.mxu0
    %v582 = vadd.f32 0.0, %v581
    %v583 = vpop.f32.mrf.mxu0
    %v584 = vpop.f32.mrf.mxu0
    %v585 = vpop.f32.mrf.mxu0
    %586 = vdwg.mxu0
    %v591 = vunpack.c.l.b16 %v507
    %v592 = vunpack.c.l.b16 %v508
    %v593 = vunpack.c.l.b16 %v509
    %v594 = vunpack.c.l.b16 %v510
    %v595 = vpack.c.b16 %v592, %v591
    %v596 = vpack.c.b16 %v594, %v593
    %599 = vmatprep.subr.bf16.mxu0 0
    %600 = vmatpush1.bf16.msra.mxu0 0
    %601 = vmatprep.subr.bf16.mxu0 0
    %602 = vmatpush1.bf16.msra.mxu0 0
    %603 = vmatprep.subr.bf16.mxu0 0
    %604 = vmatpush1.bf16.msra.mxu0 0
    %605 = vmatprep.subr.bf16.mxu0 0
    %606 = vmatpush1.bf16.msra.mxu0 0
    %607 = vmatprep.subr.bf16.mxu0 0
    %608 = vmatpush1.bf16.msra.mxu0 0
    %609 = vmatprep.subr.bf16.mxu0 0
    %610 = vmatpush1.bf16.msra.mxu0 0
    %611 = vmatprep.subr.bf16.mxu0 0
    %612 = vmatpush1.bf16.msra.mxu0 %v596
    %613 = vmatprep.subr.bf16.mxu0 0
    %614 = vmatpush1.bf16.msra.mxu0 %v595
    %615 = vmatprep.subr.bf16.mxu0 0
    %616 = vmatpush2.bf16.msra.mxu0 0
    %617 = vmatprep.subr.bf16.mxu0 0
    %618 = vmatpush2.bf16.msra.mxu0 0
    %619 = vmatprep.subr.bf16.mxu0 0
    %620 = vmatpush2.bf16.msra.mxu0 0
    %621 = vmatprep.subr.bf16.mxu0 0
    %622 = vmatpush2.bf16.msra.mxu0 0
    %623 = vmatprep.subr.bf16.mxu0 0
    %624 = vmatpush2.bf16.msra.mxu0 0
    %625 = vmatprep.subr.bf16.mxu0 0
    %626 = vmatpush2.bf16.msra.mxu0 0
    %627 = vmatprep.subr.bf16.mxu0 0
    %628 = vmatpush2.bf16.msra.mxu0 0
    %629 = vmatprep.subr.bf16.mxu0 0
    %630 = vmatpush2.bf16.msra.mxu0 0
    %631 = vmatprep.mubr.bf16.mxu0 0
    %632 = vmatmul.mubr.bf16.gmra.mxu0 %v131
    %v633 = vpop.f32.mrf.mxu0
    %v634 = vadd.f32 0.0, %v633
    %v635 = vpop.f32.mrf.mxu0
    %v636 = vpop.f32.mrf.mxu0
    %v637 = vpop.f32.mrf.mxu0
    %638 = vdwg.mxu0
    %v643 = vunpack.c.l.b16 %v511
    %v644 = vunpack.c.l.b16 %v512
    %v645 = vunpack.c.l.b16 %v513
    %v646 = vunpack.c.l.b16 %v514
    %v647 = vpack.c.b16 %v644, %v643
    %v648 = vpack.c.b16 %v646, %v645
    %651 = vmatprep.subr.bf16.mxu0 0
    %652 = vmatpush1.bf16.msra.mxu0 0
    %653 = vmatprep.subr.bf16.mxu0 0
    %654 = vmatpush1.bf16.msra.mxu0 0
    %655 = vmatprep.subr.bf16.mxu0 0
    %656 = vmatpush1.bf16.msra.mxu0 0
    %657 = vmatprep.subr.bf16.mxu0 0
    %658 = vmatpush1.bf16.msra.mxu0 0
    %659 = vmatprep.subr.bf16.mxu0 0
    %660 = vmatpush1.bf16.msra.mxu0 0
    %661 = vmatprep.subr.bf16.mxu0 0
    %662 = vmatpush1.bf16.msra.mxu0 0
    %663 = vmatprep.subr.bf16.mxu0 0
    %664 = vmatpush1.bf16.msra.mxu0 %v648
    %665 = vmatprep.subr.bf16.mxu0 0
    %666 = vmatpush1.bf16.msra.mxu0 %v647
    %667 = vmatprep.subr.bf16.mxu0 0
    %668 = vmatpush2.bf16.msra.mxu0 0
    %669 = vmatprep.subr.bf16.mxu0 0
    %670 = vmatpush2.bf16.msra.mxu0 0
    %671 = vmatprep.subr.bf16.mxu0 0
    %672 = vmatpush2.bf16.msra.mxu0 0
    %673 = vmatprep.subr.bf16.mxu0 0
    %674 = vmatpush2.bf16.msra.mxu0 0
    %675 = vmatprep.subr.bf16.mxu0 0
    %676 = vmatpush2.bf16.msra.mxu0 0
    %677 = vmatprep.subr.bf16.mxu0 0
    %678 = vmatpush2.bf16.msra.mxu0 0
    %679 = vmatprep.subr.bf16.mxu0 0
    %680 = vmatpush2.bf16.msra.mxu0 0
    %681 = vmatprep.subr.bf16.mxu0 0
    %682 = vmatpush2.bf16.msra.mxu0 0
    %683 = vmatprep.mubr.bf16.mxu0 0
    %684 = vmatmul.mubr.bf16.gmra.mxu0 %v186
    %v685 = vpop.f32.mrf.mxu0
    %v686 = vadd.f32 0.0, %v685
    %v687 = vpop.f32.mrf.mxu0
    %v688 = vpop.f32.mrf.mxu0
    %v689 = vpop.f32.mrf.mxu0
    %690 = vdwg.mxu0
    %v695 = vunpack.c.l.b16 %v515
    %v696 = vunpack.c.l.b16 %v516
    %v697 = vunpack.c.l.b16 %v517
    %v698 = vunpack.c.l.b16 %v518
    %v699 = vpack.c.b16 %v696, %v695
    %v700 = vpack.c.b16 %v698, %v697
    %703 = vmatprep.subr.bf16.mxu0 0
    %704 = vmatpush1.bf16.msra.mxu0 0
    %705 = vmatprep.subr.bf16.mxu0 0
    %706 = vmatpush1.bf16.msra.mxu0 0
    %707 = vmatprep.subr.bf16.mxu0 0
    %708 = vmatpush1.bf16.msra.mxu0 0
    %709 = vmatprep.subr.bf16.mxu0 0
    %710 = vmatpush1.bf16.msra.mxu0 0
    %711 = vmatprep.subr.bf16.mxu0 0
    %712 = vmatpush1.bf16.msra.mxu0 0
    %713 = vmatprep.subr.bf16.mxu0 0
    %714 = vmatpush1.bf16.msra.mxu0 0
    %715 = vmatprep.subr.bf16.mxu0 0
    %716 = vmatpush1.bf16.msra.mxu0 %v700
    %717 = vmatprep.subr.bf16.mxu0 0
    %718 = vmatpush1.bf16.msra.mxu0 %v699
    %719 = vmatprep.subr.bf16.mxu0 0
    %720 = vmatpush2.bf16.msra.mxu0 0
    %721 = vmatprep.subr.bf16.mxu0 0
    %722 = vmatpush2.bf16.msra.mxu0 0
    %723 = vmatprep.subr.bf16.mxu0 0
    %724 = vmatpush2.bf16.msra.mxu0 0
    %725 = vmatprep.subr.bf16.mxu0 0
    %726 = vmatpush2.bf16.msra.mxu0 0
    %727 = vmatprep.subr.bf16.mxu0 0
    %728 = vmatpush2.bf16.msra.mxu0 0
    %729 = vmatprep.subr.bf16.mxu0 0
    %730 = vmatpush2.bf16.msra.mxu0 0
    %731 = vmatprep.subr.bf16.mxu0 0
    %732 = vmatpush2.bf16.msra.mxu0 0
    %733 = vmatprep.subr.bf16.mxu0 0
    %734 = vmatpush2.bf16.msra.mxu0 0
    %735 = vmatprep.mubr.bf16.mxu0 0
    %736 = vmatmul.mubr.bf16.gmra.mxu0 %v241
    %v737 = vpop.f32.mrf.mxu0
    %v738 = vadd.f32 0.0, %v737
    %v739 = vpop.f32.mrf.mxu0
    %v740 = vpop.f32.mrf.mxu0
    %v741 = vpop.f32.mrf.mxu0
    %742 = vdwg.mxu0
    %v747 = vunpack.c.l.b16 %v519
    %v748 = vunpack.c.l.b16 %v520
    %v749 = vunpack.c.l.b16 %v521
    %v750 = vunpack.c.l.b16 %v522
    %v751 = vpack.c.b16 %v748, %v747
    %v752 = vpack.c.b16 %v750, %v749
    %755 = vmatprep.subr.bf16.mxu0 0
    %756 = vmatpush1.bf16.msra.mxu0 0
    %757 = vmatprep.subr.bf16.mxu0 0
    %758 = vmatpush1.bf16.msra.mxu0 0
    %759 = vmatprep.subr.bf16.mxu0 0
    %760 = vmatpush1.bf16.msra.mxu0 0
    %761 = vmatprep.subr.bf16.mxu0 0
    %762 = vmatpush1.bf16.msra.mxu0 0
    %763 = vmatprep.subr.bf16.mxu0 0
    %764 = vmatpush1.bf16.msra.mxu0 0
    %765 = vmatprep.subr.bf16.mxu0 0
    %766 = vmatpush1.bf16.msra.mxu0 0
    %767 = vmatprep.subr.bf16.mxu0 0
    %768 = vmatpush1.bf16.msra.mxu0 %v752
    %769 = vmatprep.subr.bf16.mxu0 0
    %770 = vmatpush1.bf16.msra.mxu0 %v751
    %771 = vmatprep.subr.bf16.mxu0 0
    %772 = vmatpush2.bf16.msra.mxu0 0
    %773 = vmatprep.subr.bf16.mxu0 0
    %774 = vmatpush2.bf16.msra.mxu0 0
    %775 = vmatprep.subr.bf16.mxu0 0
    %776 = vmatpush2.bf16.msra.mxu0 0
    %777 = vmatprep.subr.bf16.mxu0 0
    %778 = vmatpush2.bf16.msra.mxu0 0
    %779 = vmatprep.subr.bf16.mxu0 0
    %780 = vmatpush2.bf16.msra.mxu0 0
    %781 = vmatprep.subr.bf16.mxu0 0
    %782 = vmatpush2.bf16.msra.mxu0 0
    %783 = vmatprep.subr.bf16.mxu0 0
    %784 = vmatpush2.bf16.msra.mxu0 0
    %785 = vmatprep.subr.bf16.mxu0 0
    %786 = vmatpush2.bf16.msra.mxu0 0
    %787 = vmatprep.mubr.bf16.mxu0 0
    %788 = vmatmul.mubr.bf16.gmra.mxu0 %v296
    %v789 = vpop.f32.mrf.mxu0
    %v790 = vadd.f32 0.0, %v789
    %v791 = vpop.f32.mrf.mxu0
    %v792 = vpop.f32.mrf.mxu0
    %v793 = vpop.f32.mrf.mxu0
    %794 = vdwg.mxu0
    %v799 = vunpack.c.l.b16 %v523
    %v800 = vunpack.c.l.b16 %v524
    %v801 = vunpack.c.l.b16 %v525
    %v802 = vunpack.c.l.b16 %v526
    %v803 = vpack.c.b16 %v800, %v799
    %v804 = vpack.c.b16 %v802, %v801
    %807 = vmatprep.subr.bf16.mxu0 0
    %808 = vmatpush1.bf16.msra.mxu0 0
    %809 = vmatprep.subr.bf16.mxu0 0
    %810 = vmatpush1.bf16.msra.mxu0 0
    %811 = vmatprep.subr.bf16.mxu0 0
    %812 = vmatpush1.bf16.msra.mxu0 0
    %813 = vmatprep.subr.bf16.mxu0 0
    %814 = vmatpush1.bf16.msra.mxu0 0
    %815 = vmatprep.subr.bf16.mxu0 0
    %816 = vmatpush1.bf16.msra.mxu0 0
    %817 = vmatprep.subr.bf16.mxu0 0
    %818 = vmatpush1.bf16.msra.mxu0 0
    %819 = vmatprep.subr.bf16.mxu0 0
    %820 = vmatpush1.bf16.msra.mxu0 %v804
    %821 = vmatprep.subr.bf16.mxu0 0
    %822 = vmatpush1.bf16.msra.mxu0 %v803
    %823 = vmatprep.subr.bf16.mxu0 0
    %824 = vmatpush2.bf16.msra.mxu0 0
    %825 = vmatprep.subr.bf16.mxu0 0
    %826 = vmatpush2.bf16.msra.mxu0 0
    %827 = vmatprep.subr.bf16.mxu0 0
    %828 = vmatpush2.bf16.msra.mxu0 0
    %829 = vmatprep.subr.bf16.mxu0 0
    %830 = vmatpush2.bf16.msra.mxu0 0
    %831 = vmatprep.subr.bf16.mxu0 0
    %832 = vmatpush2.bf16.msra.mxu0 0
    %833 = vmatprep.subr.bf16.mxu0 0
    %834 = vmatpush2.bf16.msra.mxu0 0
    %835 = vmatprep.subr.bf16.mxu0 0
    %836 = vmatpush2.bf16.msra.mxu0 0
    %837 = vmatprep.subr.bf16.mxu0 0
    %838 = vmatpush2.bf16.msra.mxu0 0
    %839 = vmatprep.mubr.bf16.mxu0 0
    %840 = vmatmul.mubr.bf16.gmra.mxu0 %v351
    %v841 = vpop.f32.mrf.mxu0
    %v842 = vadd.f32 0.0, %v841
    %v843 = vpop.f32.mrf.mxu0
    %v844 = vpop.f32.mrf.mxu0
    %v845 = vpop.f32.mrf.mxu0
    %846 = vdwg.mxu0
    %v851 = vunpack.c.l.b16 %v527
    %v852 = vunpack.c.l.b16 %v528
    %v853 = vunpack.c.l.b16 %v529
    %v854 = vunpack.c.l.b16 %v530
    %v855 = vpack.c.b16 %v852, %v851
    %v856 = vpack.c.b16 %v854, %v853
    %859 = vmatprep.subr.bf16.mxu0 0
    %860 = vmatpush1.bf16.msra.mxu0 0
    %861 = vmatprep.subr.bf16.mxu0 0
    %862 = vmatpush1.bf16.msra.mxu0 0
    %863 = vmatprep.subr.bf16.mxu0 0
    %864 = vmatpush1.bf16.msra.mxu0 0
    %865 = vmatprep.subr.bf16.mxu0 0
    %866 = vmatpush1.bf16.msra.mxu0 0
    %867 = vmatprep.subr.bf16.mxu0 0
    %868 = vmatpush1.bf16.msra.mxu0 0
    %869 = vmatprep.subr.bf16.mxu0 0
    %870 = vmatpush1.bf16.msra.mxu0 0
    %871 = vmatprep.subr.bf16.mxu0 0
    %872 = vmatpush1.bf16.msra.mxu0 %v856
    %873 = vmatprep.subr.bf16.mxu0 0
    %874 = vmatpush1.bf16.msra.mxu0 %v855
    %875 = vmatprep.subr.bf16.mxu0 0
    %876 = vmatpush2.bf16.msra.mxu0 0
    %877 = vmatprep.subr.bf16.mxu0 0
    %878 = vmatpush2.bf16.msra.mxu0 0
    %879 = vmatprep.subr.bf16.mxu0 0
    %880 = vmatpush2.bf16.msra.mxu0 0
    %881 = vmatprep.subr.bf16.mxu0 0
    %882 = vmatpush2.bf16.msra.mxu0 0
    %883 = vmatprep.subr.bf16.mxu0 0
    %884 = vmatpush2.bf16.msra.mxu0 0
    %885 = vmatprep.subr.bf16.mxu0 0
    %886 = vmatpush2.bf16.msra.mxu0 0
    %887 = vmatprep.subr.bf16.mxu0 0
    %888 = vmatpush2.bf16.msra.mxu0 0
    %889 = vmatprep.subr.bf16.mxu0 0
    %890 = vmatpush2.bf16.msra.mxu0 0
    %891 = vmatprep.mubr.bf16.mxu0 0
    %892 = vmatmul.mubr.bf16.gmra.mxu0 %v406
    %v893 = vpop.f32.mrf.mxu0
    %v894 = vadd.f32 0.0, %v893
    %v895 = vpop.f32.mrf.mxu0
    %v896 = vpop.f32.mrf.mxu0
    %v897 = vpop.f32.mrf.mxu0
    %898 = vdwg.mxu0
    %v903 = vunpack.c.l.b16 %v531
    %v904 = vunpack.c.l.b16 %v532
    %v905 = vunpack.c.l.b16 %v533
    %v906 = vunpack.c.l.b16 %v534
    %v907 = vpack.c.b16 %v904, %v903
    %v908 = vpack.c.b16 %v906, %v905
    %911 = vmatprep.subr.bf16.mxu0 0
    %912 = vmatpush1.bf16.msra.mxu0 0
    %913 = vmatprep.subr.bf16.mxu0 0
    %914 = vmatpush1.bf16.msra.mxu0 0
    %915 = vmatprep.subr.bf16.mxu0 0
    %916 = vmatpush1.bf16.msra.mxu0 0
    %917 = vmatprep.subr.bf16.mxu0 0
    %918 = vmatpush1.bf16.msra.mxu0 0
    %919 = vmatprep.subr.bf16.mxu0 0
    %920 = vmatpush1.bf16.msra.mxu0 0
    %921 = vmatprep.subr.bf16.mxu0 0
    %922 = vmatpush1.bf16.msra.mxu0 0
    %923 = vmatprep.subr.bf16.mxu0 0
    %924 = vmatpush1.bf16.msra.mxu0 %v908
    %925 = vmatprep.subr.bf16.mxu0 0
    %926 = vmatpush1.bf16.msra.mxu0 %v907
    %927 = vmatprep.subr.bf16.mxu0 0
    %928 = vmatpush2.bf16.msra.mxu0 0
    %929 = vmatprep.subr.bf16.mxu0 0
    %930 = vmatpush2.bf16.msra.mxu0 0
    %931 = vmatprep.subr.bf16.mxu0 0
    %932 = vmatpush2.bf16.msra.mxu0 0
    %933 = vmatprep.subr.bf16.mxu0 0
    %934 = vmatpush2.bf16.msra.mxu0 0
    %935 = vmatprep.subr.bf16.mxu0 0
    %936 = vmatpush2.bf16.msra.mxu0 0
    %937 = vmatprep.subr.bf16.mxu0 0
    %938 = vmatpush2.bf16.msra.mxu0 0
    %939 = vmatprep.subr.bf16.mxu0 0
    %940 = vmatpush2.bf16.msra.mxu0 0
    %941 = vmatprep.subr.bf16.mxu0 0
    %942 = vmatpush2.bf16.msra.mxu0 0
    %943 = vmatprep.mubr.bf16.mxu0 0
    %944 = vmatmul.mubr.bf16.gmra.mxu0 %v461
    %v945 = vpop.f32.mrf.mxu0
    %v946 = vadd.f32 0.0, %v945
    %v947 = vpop.f32.mrf.mxu0
    %v948 = vpop.f32.mrf.mxu0
    %v949 = vpop.f32.mrf.mxu0
    %950 = vdwg.mxu0
    %v951 = vld [vmem:[%s3] sm:$0xff]
    %vm952 = vcmask 64512
    %v954 = vsel %vm952, %v113, 0
    %956 = vmatprep.subr.mxu0 0.0
    %957 = vmatpush1.xpose.msra.mxu0 0.0
    %958 = vmatprep.subr.mxu0 0.0
    %959 = vmatpush1.xpose.msra.mxu0 0.0
    %960 = vmatprep.subr.mxu0 0.0
    %961 = vmatpush1.xpose.msra.mxu0 0.0
    %962 = vmatprep.subr.mxu0 0.0
    %963 = vmatpush1.xpose.msra.mxu0 0.0
    %964 = vmatprep.subr.mxu0 0.0
    %965 = vmatpush1.xpose.msra.mxu0 0.0
    %966 = vmatprep.subr.mxu0 0.0
    %967 = vmatpush1.xpose.msra.mxu0 0.0
    %968 = vmatprep.subr.mxu0 0.0
    %969 = vmatpush1.xpose.msra.mxu0 0.0
    %970 = vmatprep.subr.mxu0 0.0
    %971 = vmatpush1.xpose.msra.mxu0 0.0
    %972 = vmatprep.subr.mxu0 0.0
    %973 = vmatpush1.xpose.msra.mxu0 0.0
    %974 = vmatprep.subr.mxu0 0.0
    %975 = vmatpush1.xpose.msra.mxu0 0.0
    %976 = vmatprep.subr.mxu0 0.0
    %977 = vmatpush1.xpose.msra.mxu0 0.0
    %978 = vmatprep.subr.mxu0 0.0
    %979 = vmatpush1.xpose.msra.mxu0 0.0
    %980 = vmatprep.subr.mxu0 0.0
    %981 = vmatpush1.xpose.msra.mxu0 0.0
    %982 = vmatprep.subr.mxu0 0.0
    %983 = vmatpush1.xpose.msra.mxu0 0.0
    %984 = vmatprep.subr.mxu0 0.0
    %985 = vmatpush1.xpose.msra.mxu0 0.0
    %986 = vmatprep.subr.mxu0 0.0
    %987 = vmatpush1.xpose.msra.mxu0 %v954
    %988 = vmatprep.subr.mxu0 0.0
    %989 = vmatpush2.xpose.msra.mxu0 0.0
    %990 = vmatprep.subr.mxu0 0.0
    %991 = vmatpush2.xpose.msra.mxu0 0.0
    %992 = vmatprep.subr.mxu0 0.0
    %993 = vmatpush2.xpose.msra.mxu0 0.0
    %994 = vmatprep.subr.mxu0 0.0
    %995 = vmatpush2.xpose.msra.mxu0 0.0
    %996 = vmatprep.subr.mxu0 0.0
    %997 = vmatpush2.xpose.msra.mxu0 0.0
    %998 = vmatprep.subr.mxu0 0.0
    %999 = vmatpush2.xpose.msra.mxu0 0.0
    %1000 = vmatprep.subr.mxu0 0.0
    %1001 = vmatpush2.xpose.msra.mxu0 0.0
    %1002 = vmatprep.subr.mxu0 0.0
    %1003 = vmatpush2.xpose.msra.mxu0 0.0
    %1004 = vmatprep.subr.mxu0 0.0
    %1005 = vmatpush2.xpose.msra.mxu0 0.0
    %1006 = vmatprep.subr.mxu0 0.0
    %1007 = vmatpush2.xpose.msra.mxu0 0.0
    %1008 = vmatprep.subr.mxu0 0.0
    %1009 = vmatpush2.xpose.msra.mxu0 0.0
    %1010 = vmatprep.subr.mxu0 0.0
    %1011 = vmatpush2.xpose.msra.mxu0 0.0
    %1012 = vmatprep.subr.mxu0 0.0
    %1013 = vmatpush2.xpose.msra.mxu0 0.0
    %1014 = vmatprep.subr.mxu0 0.0
    %1015 = vmatpush2.xpose.msra.mxu0 0.0
    %1016 = vmatprep.subr.mxu0 0.0
    %1017 = vmatpush2.xpose.msra.mxu0 0.0
    %1018 = vmatprep.subr.mxu0 0.0
    %1019 = vmatpush2.xpose.msra.mxu0 0.0
    %1020 = vmatprep.mubr.f32.mxu0 0.0
    %1021 = vmatmul.mubr.f32.gmra.mxu0 %v954
    %v1022 = vpop.f32.mrf.mxu0
    %v1023 = vadd.f32 %v951, %v1022
    %v1024 = vpop.f32.mrf.mxu0
    %1025 = vdwg.mxu0
    %v1027 = vsel %vm952, %v168, 0
    %1029 = vmatprep.subr.mxu0 0.0
    %1030 = vmatpush1.xpose.msra.mxu0 0.0
    %1031 = vmatprep.subr.mxu0 0.0
    %1032 = vmatpush1.xpose.msra.mxu0 0.0
    %1033 = vmatprep.subr.mxu0 0.0
    %1034 = vmatpush1.xpose.msra.mxu0 0.0
    %1035 = vmatprep.subr.mxu0 0.0
    %1036 = vmatpush1.xpose.msra.mxu0 0.0
    %1037 = vmatprep.subr.mxu0 0.0
    %1038 = vmatpush1.xpose.msra.mxu0 0.0
    %1039 = vmatprep.subr.mxu0 0.0
    %1040 = vmatpush1.xpose.msra.mxu0 0.0
    %1041 = vmatprep.subr.mxu0 0.0
    %1042 = vmatpush1.xpose.msra.mxu0 0.0
    %1043 = vmatprep.subr.mxu0 0.0
    %1044 = vmatpush1.xpose.msra.mxu0 0.0
    %1045 = vmatprep.subr.mxu0 0.0
    %1046 = vmatpush1.xpose.msra.mxu0 0.0
    %1047 = vmatprep.subr.mxu0 0.0
    %1048 = vmatpush1.xpose.msra.mxu0 0.0
    %1049 = vmatprep.subr.mxu0 0.0
    %1050 = vmatpush1.xpose.msra.mxu0 0.0
    %1051 = vmatprep.subr.mxu0 0.0
    %1052 = vmatpush1.xpose.msra.mxu0 0.0
    %1053 = vmatprep.subr.mxu0 0.0
    %1054 = vmatpush1.xpose.msra.mxu0 0.0
    %1055 = vmatprep.subr.mxu0 0.0
    %1056 = vmatpush1.xpose.msra.mxu0 0.0
    %1057 = vmatprep.subr.mxu0 0.0
    %1058 = vmatpush1.xpose.msra.mxu0 0.0
    %1059 = vmatprep.subr.mxu0 0.0
    %1060 = vmatpush1.xpose.msra.mxu0 %v1027
    %1061 = vmatprep.subr.mxu0 0.0
    %1062 = vmatpush2.xpose.msra.mxu0 0.0
    %1063 = vmatprep.subr.mxu0 0.0
    %1064 = vmatpush2.xpose.msra.mxu0 0.0
    %1065 = vmatprep.subr.mxu0 0.0
    %1066 = vmatpush2.xpose.msra.mxu0 0.0
    %1067 = vmatprep.subr.mxu0 0.0
    %1068 = vmatpush2.xpose.msra.mxu0 0.0
    %1069 = vmatprep.subr.mxu0 0.0
    %1070 = vmatpush2.xpose.msra.mxu0 0.0
    %1071 = vmatprep.subr.mxu0 0.0
    %1072 = vmatpush2.xpose.msra.mxu0 0.0
    %1073 = vmatprep.subr.mxu0 0.0
    %1074 = vmatpush2.xpose.msra.mxu0 0.0
    %1075 = vmatprep.subr.mxu0 0.0
    %1076 = vmatpush2.xpose.msra.mxu0 0.0
    %1077 = vmatprep.subr.mxu0 0.0
    %1078 = vmatpush2.xpose.msra.mxu0 0.0
    %1079 = vmatprep.subr.mxu0 0.0
    %1080 = vmatpush2.xpose.msra.mxu0 0.0
    %1081 = vmatprep.subr.mxu0 0.0
    %1082 = vmatpush2.xpose.msra.mxu0 0.0
    %1083 = vmatprep.subr.mxu0 0.0
    %1084 = vmatpush2.xpose.msra.mxu0 0.0
    %1085 = vmatprep.subr.mxu0 0.0
    %1086 = vmatpush2.xpose.msra.mxu0 0.0
    %1087 = vmatprep.subr.mxu0 0.0
    %1088 = vmatpush2.xpose.msra.mxu0 0.0
    %1089 = vmatprep.subr.mxu0 0.0
    %1090 = vmatpush2.xpose.msra.mxu0 0.0
    %1091 = vmatprep.subr.mxu0 0.0
    %1092 = vmatpush2.xpose.msra.mxu0 0.0
    %1093 = vmatprep.mubr.f32.mxu0 0.0
    %1094 = vmatmul.mubr.f32.gmra.mxu0 %v1027
    %v1095 = vpop.f32.mrf.mxu0
    %v1096 = vadd.f32 %v951, %v1095
    %v1097 = vpop.f32.mrf.mxu0
    %1098 = vdwg.mxu0
    %v1100 = vsel %vm952, %v223, 0
    %1102 = vmatprep.subr.mxu0 0.0
    %1103 = vmatpush1.xpose.msra.mxu0 0.0
    %1104 = vmatprep.subr.mxu0 0.0
    %1105 = vmatpush1.xpose.msra.mxu0 0.0
    %1106 = vmatprep.subr.mxu0 0.0
    %1107 = vmatpush1.xpose.msra.mxu0 0.0
    %1108 = vmatprep.subr.mxu0 0.0
    %1109 = vmatpush1.xpose.msra.mxu0 0.0
    %1110 = vmatprep.subr.mxu0 0.0
    %1111 = vmatpush1.xpose.msra.mxu0 0.0
    %1112 = vmatprep.subr.mxu0 0.0
    %1113 = vmatpush1.xpose.msra.mxu0 0.0
    %1114 = vmatprep.subr.mxu0 0.0
    %1115 = vmatpush1.xpose.msra.mxu0 0.0
    %1116 = vmatprep.subr.mxu0 0.0
    %1117 = vmatpush1.xpose.msra.mxu0 0.0
    %1118 = vmatprep.subr.mxu0 0.0
    %1119 = vmatpush1.xpose.msra.mxu0 0.0
    %1120 = vmatprep.subr.mxu0 0.0
    %1121 = vmatpush1.xpose.msra.mxu0 0.0
    %1122 = vmatprep.subr.mxu0 0.0
    %1123 = vmatpush1.xpose.msra.mxu0 0.0
    %1124 = vmatprep.subr.mxu0 0.0
    %1125 = vmatpush1.xpose.msra.mxu0 0.0
    %1126 = vmatprep.subr.mxu0 0.0
    %1127 = vmatpush1.xpose.msra.mxu0 0.0
    %1128 = vmatprep.subr.mxu0 0.0
    %1129 = vmatpush1.xpose.msra.mxu0 0.0
    %1130 = vmatprep.subr.mxu0 0.0
    %1131 = vmatpush1.xpose.msra.mxu0 0.0
    %1132 = vmatprep.subr.mxu0 0.0
    %1133 = vmatpush1.xpose.msra.mxu0 %v1100
    %1134 = vmatprep.subr.mxu0 0.0
    %1135 = vmatpush2.xpose.msra.mxu0 0.0
    %1136 = vmatprep.subr.mxu0 0.0
    %1137 = vmatpush2.xpose.msra.mxu0 0.0
    %1138 = vmatprep.subr.mxu0 0.0
    %1139 = vmatpush2.xpose.msra.mxu0 0.0
    %1140 = vmatprep.subr.mxu0 0.0
    %1141 = vmatpush2.xpose.msra.mxu0 0.0
    %1142 = vmatprep.subr.mxu0 0.0
    %1143 = vmatpush2.xpose.msra.mxu0 0.0
    %1144 = vmatprep.subr.mxu0 0.0
    %1145 = vmatpush2.xpose.msra.mxu0 0.0
    %1146 = vmatprep.subr.mxu0 0.0
    %1147 = vmatpush2.xpose.msra.mxu0 0.0
    %1148 = vmatprep.subr.mxu0 0.0
    %1149 = vmatpush2.xpose.msra.mxu0 0.0
    %1150 = vmatprep.subr.mxu0 0.0
    %1151 = vmatpush2.xpose.msra.mxu0 0.0
    %1152 = vmatprep.subr.mxu0 0.0
    %1153 = vmatpush2.xpose.msra.mxu0 0.0
    %1154 = vmatprep.subr.mxu0 0.0
    %1155 = vmatpush2.xpose.msra.mxu0 0.0
    %1156 = vmatprep.subr.mxu0 0.0
    %1157 = vmatpush2.xpose.msra.mxu0 0.0
    %1158 = vmatprep.subr.mxu0 0.0
    %1159 = vmatpush2.xpose.msra.mxu0 0.0
    %1160 = vmatprep.subr.mxu0 0.0
    %1161 = vmatpush2.xpose.msra.mxu0 0.0
    %1162 = vmatprep.subr.mxu0 0.0
    %1163 = vmatpush2.xpose.msra.mxu0 0.0
    %1164 = vmatprep.subr.mxu0 0.0
    %1165 = vmatpush2.xpose.msra.mxu0 0.0
    %1166 = vmatprep.mubr.f32.mxu0 0.0
    %1167 = vmatmul.mubr.f32.gmra.mxu0 %v1100
    %v1168 = vpop.f32.mrf.mxu0
    %v1169 = vadd.f32 %v951, %v1168
    %v1170 = vpop.f32.mrf.mxu0
    %1171 = vdwg.mxu0
    %v1173 = vsel %vm952, %v278, 0
    %1175 = vmatprep.subr.mxu0 0.0
    %1176 = vmatpush1.xpose.msra.mxu0 0.0
    %1177 = vmatprep.subr.mxu0 0.0
    %1178 = vmatpush1.xpose.msra.mxu0 0.0
    %1179 = vmatprep.subr.mxu0 0.0
    %1180 = vmatpush1.xpose.msra.mxu0 0.0
    %1181 = vmatprep.subr.mxu0 0.0
    %1182 = vmatpush1.xpose.msra.mxu0 0.0
    %1183 = vmatprep.subr.mxu0 0.0
    %1184 = vmatpush1.xpose.msra.mxu0 0.0
    %1185 = vmatprep.subr.mxu0 0.0
    %1186 = vmatpush1.xpose.msra.mxu0 0.0
    %1187 = vmatprep.subr.mxu0 0.0
    %1188 = vmatpush1.xpose.msra.mxu0 0.0
    %1189 = vmatprep.subr.mxu0 0.0
    %1190 = vmatpush1.xpose.msra.mxu0 0.0
    %1191 = vmatprep.subr.mxu0 0.0
    %1192 = vmatpush1.xpose.msra.mxu0 0.0
    %1193 = vmatprep.subr.mxu0 0.0
    %1194 = vmatpush1.xpose.msra.mxu0 0.0
    %1195 = vmatprep.subr.mxu0 0.0
    %1196 = vmatpush1.xpose.msra.mxu0 0.0
    %1197 = vmatprep.subr.mxu0 0.0
    %1198 = vmatpush1.xpose.msra.mxu0 0.0
    %1199 = vmatprep.subr.mxu0 0.0
    %1200 = vmatpush1.xpose.msra.mxu0 0.0
    %1201 = vmatprep.subr.mxu0 0.0
    %1202 = vmatpush1.xpose.msra.mxu0 0.0
    %1203 = vmatprep.subr.mxu0 0.0
    %1204 = vmatpush1.xpose.msra.mxu0 0.0
    %1205 = vmatprep.subr.mxu0 0.0
    %1206 = vmatpush1.xpose.msra.mxu0 %v1173
    %1207 = vmatprep.subr.mxu0 0.0
    %1208 = vmatpush2.xpose.msra.mxu0 0.0
    %1209 = vmatprep.subr.mxu0 0.0
    %1210 = vmatpush2.xpose.msra.mxu0 0.0
    %1211 = vmatprep.subr.mxu0 0.0
    %1212 = vmatpush2.xpose.msra.mxu0 0.0
    %1213 = vmatprep.subr.mxu0 0.0
    %1214 = vmatpush2.xpose.msra.mxu0 0.0
    %1215 = vmatprep.subr.mxu0 0.0
    %1216 = vmatpush2.xpose.msra.mxu0 0.0
    %1217 = vmatprep.subr.mxu0 0.0
    %1218 = vmatpush2.xpose.msra.mxu0 0.0
    %1219 = vmatprep.subr.mxu0 0.0
    %1220 = vmatpush2.xpose.msra.mxu0 0.0
    %1221 = vmatprep.subr.mxu0 0.0
    %1222 = vmatpush2.xpose.msra.mxu0 0.0
    %1223 = vmatprep.subr.mxu0 0.0
    %1224 = vmatpush2.xpose.msra.mxu0 0.0
    %1225 = vmatprep.subr.mxu0 0.0
    %1226 = vmatpush2.xpose.msra.mxu0 0.0
    %1227 = vmatprep.subr.mxu0 0.0
    %1228 = vmatpush2.xpose.msra.mxu0 0.0
    %1229 = vmatprep.subr.mxu0 0.0
    %1230 = vmatpush2.xpose.msra.mxu0 0.0
    %1231 = vmatprep.subr.mxu0 0.0
    %1232 = vmatpush2.xpose.msra.mxu0 0.0
    %1233 = vmatprep.subr.mxu0 0.0
    %1234 = vmatpush2.xpose.msra.mxu0 0.0
    %1235 = vmatprep.subr.mxu0 0.0
    %1236 = vmatpush2.xpose.msra.mxu0 0.0
    %1237 = vmatprep.subr.mxu0 0.0
    %1238 = vmatpush2.xpose.msra.mxu0 0.0
    %1239 = vmatprep.mubr.f32.mxu0 0.0
    %1240 = vmatmul.mubr.f32.gmra.mxu0 %v1173
    %v1241 = vpop.f32.mrf.mxu0
    %v1242 = vadd.f32 %v951, %v1241
    %v1243 = vpop.f32.mrf.mxu0
    %1244 = vdwg.mxu0
    %v1246 = vsel %vm952, %v333, 0
    %1248 = vmatprep.subr.mxu0 0.0
    %1249 = vmatpush1.xpose.msra.mxu0 0.0
    %1250 = vmatprep.subr.mxu0 0.0
    %1251 = vmatpush1.xpose.msra.mxu0 0.0
    %1252 = vmatprep.subr.mxu0 0.0
    %1253 = vmatpush1.xpose.msra.mxu0 0.0
    %1254 = vmatprep.subr.mxu0 0.0
    %1255 = vmatpush1.xpose.msra.mxu0 0.0
    %1256 = vmatprep.subr.mxu0 0.0
    %1257 = vmatpush1.xpose.msra.mxu0 0.0
    %1258 = vmatprep.subr.mxu0 0.0
    %1259 = vmatpush1.xpose.msra.mxu0 0.0
    %1260 = vmatprep.subr.mxu0 0.0
    %1261 = vmatpush1.xpose.msra.mxu0 0.0
    %1262 = vmatprep.subr.mxu0 0.0
    %1263 = vmatpush1.xpose.msra.mxu0 0.0
    %1264 = vmatprep.subr.mxu0 0.0
    %1265 = vmatpush1.xpose.msra.mxu0 0.0
    %1266 = vmatprep.subr.mxu0 0.0
    %1267 = vmatpush1.xpose.msra.mxu0 0.0
    %1268 = vmatprep.subr.mxu0 0.0
    %1269 = vmatpush1.xpose.msra.mxu0 0.0
    %1270 = vmatprep.subr.mxu0 0.0
    %1271 = vmatpush1.xpose.msra.mxu0 0.0
    %1272 = vmatprep.subr.mxu0 0.0
    %1273 = vmatpush1.xpose.msra.mxu0 0.0
    %1274 = vmatprep.subr.mxu0 0.0
    %1275 = vmatpush1.xpose.msra.mxu0 0.0
    %1276 = vmatprep.subr.mxu0 0.0
    %1277 = vmatpush1.xpose.msra.mxu0 0.0
    %1278 = vmatprep.subr.mxu0 0.0
    %1279 = vmatpush1.xpose.msra.mxu0 %v1246
    %1280 = vmatprep.subr.mxu0 0.0
    %1281 = vmatpush2.xpose.msra.mxu0 0.0
    %1282 = vmatprep.subr.mxu0 0.0
    %1283 = vmatpush2.xpose.msra.mxu0 0.0
    %1284 = vmatprep.subr.mxu0 0.0
    %1285 = vmatpush2.xpose.msra.mxu0 0.0
    %1286 = vmatprep.subr.mxu0 0.0
    %1287 = vmatpush2.xpose.msra.mxu0 0.0
    %1288 = vmatprep.subr.mxu0 0.0
    %1289 = vmatpush2.xpose.msra.mxu0 0.0
    %1290 = vmatprep.subr.mxu0 0.0
    %1291 = vmatpush2.xpose.msra.mxu0 0.0
    %1292 = vmatprep.subr.mxu0 0.0
    %1293 = vmatpush2.xpose.msra.mxu0 0.0
    %1294 = vmatprep.subr.mxu0 0.0
    %1295 = vmatpush2.xpose.msra.mxu0 0.0
    %1296 = vmatprep.subr.mxu0 0.0
    %1297 = vmatpush2.xpose.msra.mxu0 0.0
    %1298 = vmatprep.subr.mxu0 0.0
    %1299 = vmatpush2.xpose.msra.mxu0 0.0
    %1300 = vmatprep.subr.mxu0 0.0
    %1301 = vmatpush2.xpose.msra.mxu0 0.0
    %1302 = vmatprep.subr.mxu0 0.0
    %1303 = vmatpush2.xpose.msra.mxu0 0.0
    %1304 = vmatprep.subr.mxu0 0.0
    %1305 = vmatpush2.xpose.msra.mxu0 0.0
    %1306 = vmatprep.subr.mxu0 0.0
    %1307 = vmatpush2.xpose.msra.mxu0 0.0
    %1308 = vmatprep.subr.mxu0 0.0
    %1309 = vmatpush2.xpose.msra.mxu0 0.0
    %1310 = vmatprep.subr.mxu0 0.0
    %1311 = vmatpush2.xpose.msra.mxu0 0.0
    %1312 = vmatprep.mubr.f32.mxu0 0.0
    %1313 = vmatmul.mubr.f32.gmra.mxu0 %v1246
    %v1314 = vpop.f32.mrf.mxu0
    %v1315 = vadd.f32 %v951, %v1314
    %v1316 = vpop.f32.mrf.mxu0
    %1317 = vdwg.mxu0
    %v1319 = vsel %vm952, %v388, 0
    %1321 = vmatprep.subr.mxu0 0.0
    %1322 = vmatpush1.xpose.msra.mxu0 0.0
    %1323 = vmatprep.subr.mxu0 0.0
    %1324 = vmatpush1.xpose.msra.mxu0 0.0
    %1325 = vmatprep.subr.mxu0 0.0
    %1326 = vmatpush1.xpose.msra.mxu0 0.0
    %1327 = vmatprep.subr.mxu0 0.0
    %1328 = vmatpush1.xpose.msra.mxu0 0.0
    %1329 = vmatprep.subr.mxu0 0.0
    %1330 = vmatpush1.xpose.msra.mxu0 0.0
    %1331 = vmatprep.subr.mxu0 0.0
    %1332 = vmatpush1.xpose.msra.mxu0 0.0
    %1333 = vmatprep.subr.mxu0 0.0
    %1334 = vmatpush1.xpose.msra.mxu0 0.0
    %1335 = vmatprep.subr.mxu0 0.0
    %1336 = vmatpush1.xpose.msra.mxu0 0.0
    %1337 = vmatprep.subr.mxu0 0.0
    %1338 = vmatpush1.xpose.msra.mxu0 0.0
    %1339 = vmatprep.subr.mxu0 0.0
    %1340 = vmatpush1.xpose.msra.mxu0 0.0
    %1341 = vmatprep.subr.mxu0 0.0
    %1342 = vmatpush1.xpose.msra.mxu0 0.0
    %1343 = vmatprep.subr.mxu0 0.0
    %1344 = vmatpush1.xpose.msra.mxu0 0.0
    %1345 = vmatprep.subr.mxu0 0.0
    %1346 = vmatpush1.xpose.msra.mxu0 0.0
    %1347 = vmatprep.subr.mxu0 0.0
    %1348 = vmatpush1.xpose.msra.mxu0 0.0
    %1349 = vmatprep.subr.mxu0 0.0
    %1350 = vmatpush1.xpose.msra.mxu0 0.0
    %1351 = vmatprep.subr.mxu0 0.0
    %1352 = vmatpush1.xpose.msra.mxu0 %v1319
    %1353 = vmatprep.subr.mxu0 0.0
    %1354 = vmatpush2.xpose.msra.mxu0 0.0
    %1355 = vmatprep.subr.mxu0 0.0
    %1356 = vmatpush2.xpose.msra.mxu0 0.0
    %1357 = vmatprep.subr.mxu0 0.0
    %1358 = vmatpush2.xpose.msra.mxu0 0.0
    %1359 = vmatprep.subr.mxu0 0.0
    %1360 = vmatpush2.xpose.msra.mxu0 0.0
    %1361 = vmatprep.subr.mxu0 0.0
    %1362 = vmatpush2.xpose.msra.mxu0 0.0
    %1363 = vmatprep.subr.mxu0 0.0
    %1364 = vmatpush2.xpose.msra.mxu0 0.0
    %1365 = vmatprep.subr.mxu0 0.0
    %1366 = vmatpush2.xpose.msra.mxu0 0.0
    %1367 = vmatprep.subr.mxu0 0.0
    %1368 = vmatpush2.xpose.msra.mxu0 0.0
    %1369 = vmatprep.subr.mxu0 0.0
    %1370 = vmatpush2.xpose.msra.mxu0 0.0
    %1371 = vmatprep.subr.mxu0 0.0
    %1372 = vmatpush2.xpose.msra.mxu0 0.0
    %1373 = vmatprep.subr.mxu0 0.0
    %1374 = vmatpush2.xpose.msra.mxu0 0.0
    %1375 = vmatprep.subr.mxu0 0.0
    %1376 = vmatpush2.xpose.msra.mxu0 0.0
    %1377 = vmatprep.subr.mxu0 0.0
    %1378 = vmatpush2.xpose.msra.mxu0 0.0
    %1379 = vmatprep.subr.mxu0 0.0
    %1380 = vmatpush2.xpose.msra.mxu0 0.0
    %1381 = vmatprep.subr.mxu0 0.0
    %1382 = vmatpush2.xpose.msra.mxu0 0.0
    %1383 = vmatprep.subr.mxu0 0.0
    %1384 = vmatpush2.xpose.msra.mxu0 0.0
    %1385 = vmatprep.mubr.f32.mxu0 0.0
    %1386 = vmatmul.mubr.f32.gmra.mxu0 %v1319
    %v1387 = vpop.f32.mrf.mxu0
    %v1388 = vadd.f32 %v951, %v1387
    %v1389 = vpop.f32.mrf.mxu0
    %1390 = vdwg.mxu0
    %v1392 = vsel %vm952, %v443, 0
    %1394 = vmatprep.subr.mxu0 0.0
    %1395 = vmatpush1.xpose.msra.mxu0 0.0
    %1396 = vmatprep.subr.mxu0 0.0
    %1397 = vmatpush1.xpose.msra.mxu0 0.0
    %1398 = vmatprep.subr.mxu0 0.0
    %1399 = vmatpush1.xpose.msra.mxu0 0.0
    %1400 = vmatprep.subr.mxu0 0.0
    %1401 = vmatpush1.xpose.msra.mxu0 0.0
    %1402 = vmatprep.subr.mxu0 0.0
    %1403 = vmatpush1.xpose.msra.mxu0 0.0
    %1404 = vmatprep.subr.mxu0 0.0
    %1405 = vmatpush1.xpose.msra.mxu0 0.0
    %1406 = vmatprep.subr.mxu0 0.0
    %1407 = vmatpush1.xpose.msra.mxu0 0.0
    %1408 = vmatprep.subr.mxu0 0.0
    %1409 = vmatpush1.xpose.msra.mxu0 0.0
    %1410 = vmatprep.subr.mxu0 0.0
    %1411 = vmatpush1.xpose.msra.mxu0 0.0
    %1412 = vmatprep.subr.mxu0 0.0
    %1413 = vmatpush1.xpose.msra.mxu0 0.0
    %1414 = vmatprep.subr.mxu0 0.0
    %1415 = vmatpush1.xpose.msra.mxu0 0.0
    %1416 = vmatprep.subr.mxu0 0.0
    %1417 = vmatpush1.xpose.msra.mxu0 0.0
    %1418 = vmatprep.subr.mxu0 0.0
    %1419 = vmatpush1.xpose.msra.mxu0 0.0
    %1420 = vmatprep.subr.mxu0 0.0
    %1421 = vmatpush1.xpose.msra.mxu0 0.0
    %1422 = vmatprep.subr.mxu0 0.0
    %1423 = vmatpush1.xpose.msra.mxu0 0.0
    %1424 = vmatprep.subr.mxu0 0.0
    %1425 = vmatpush1.xpose.msra.mxu0 %v1392
    %1426 = vmatprep.subr.mxu0 0.0
    %1427 = vmatpush2.xpose.msra.mxu0 0.0
    %1428 = vmatprep.subr.mxu0 0.0
    %1429 = vmatpush2.xpose.msra.mxu0 0.0
    %1430 = vmatprep.subr.mxu0 0.0
    %1431 = vmatpush2.xpose.msra.mxu0 0.0
    %1432 = vmatprep.subr.mxu0 0.0
    %1433 = vmatpush2.xpose.msra.mxu0 0.0
    %1434 = vmatprep.subr.mxu0 0.0
    %1435 = vmatpush2.xpose.msra.mxu0 0.0
    %1436 = vmatprep.subr.mxu0 0.0
    %1437 = vmatpush2.xpose.msra.mxu0 0.0
    %1438 = vmatprep.subr.mxu0 0.0
    %1439 = vmatpush2.xpose.msra.mxu0 0.0
    %1440 = vmatprep.subr.mxu0 0.0
    %1441 = vmatpush2.xpose.msra.mxu0 0.0
    %1442 = vmatprep.subr.mxu0 0.0
    %1443 = vmatpush2.xpose.msra.mxu0 0.0
    %1444 = vmatprep.subr.mxu0 0.0
    %1445 = vmatpush2.xpose.msra.mxu0 0.0
    %1446 = vmatprep.subr.mxu0 0.0
    %1447 = vmatpush2.xpose.msra.mxu0 0.0
    %1448 = vmatprep.subr.mxu0 0.0
    %1449 = vmatpush2.xpose.msra.mxu0 0.0
    %1450 = vmatprep.subr.mxu0 0.0
    %1451 = vmatpush2.xpose.msra.mxu0 0.0
    %1452 = vmatprep.subr.mxu0 0.0
    %1453 = vmatpush2.xpose.msra.mxu0 0.0
    %1454 = vmatprep.subr.mxu0 0.0
    %1455 = vmatpush2.xpose.msra.mxu0 0.0
    %1456 = vmatprep.subr.mxu0 0.0
    %1457 = vmatpush2.xpose.msra.mxu0 0.0
    %1458 = vmatprep.mubr.f32.mxu0 0.0
    %1459 = vmatmul.mubr.f32.gmra.mxu0 %v1392
    %v1460 = vpop.f32.mrf.mxu0
    %v1461 = vadd.f32 %v951, %v1460
    %v1462 = vpop.f32.mrf.mxu0
    %1463 = vdwg.mxu0
    %v1465 = vsel %vm952, %v498, 0
    %1467 = vmatprep.subr.mxu0 0.0
    %1468 = vmatpush1.xpose.msra.mxu0 0.0
    %1469 = vmatprep.subr.mxu0 0.0
    %1470 = vmatpush1.xpose.msra.mxu0 0.0
    %1471 = vmatprep.subr.mxu0 0.0
    %1472 = vmatpush1.xpose.msra.mxu0 0.0
    %1473 = vmatprep.subr.mxu0 0.0
    %1474 = vmatpush1.xpose.msra.mxu0 0.0
    %1475 = vmatprep.subr.mxu0 0.0
    %1476 = vmatpush1.xpose.msra.mxu0 0.0
    %1477 = vmatprep.subr.mxu0 0.0
    %1478 = vmatpush1.xpose.msra.mxu0 0.0
    %1479 = vmatprep.subr.mxu0 0.0
    %1480 = vmatpush1.xpose.msra.mxu0 0.0
    %1481 = vmatprep.subr.mxu0 0.0
    %1482 = vmatpush1.xpose.msra.mxu0 0.0
    %1483 = vmatprep.subr.mxu0 0.0
    %1484 = vmatpush1.xpose.msra.mxu0 0.0
    %1485 = vmatprep.subr.mxu0 0.0
    %1486 = vmatpush1.xpose.msra.mxu0 0.0
    %1487 = vmatprep.subr.mxu0 0.0
    %1488 = vmatpush1.xpose.msra.mxu0 0.0
    %1489 = vmatprep.subr.mxu0 0.0
    %1490 = vmatpush1.xpose.msra.mxu0 0.0
    %1491 = vmatprep.subr.mxu0 0.0
    %1492 = vmatpush1.xpose.msra.mxu0 0.0
    %1493 = vmatprep.subr.mxu0 0.0
    %1494 = vmatpush1.xpose.msra.mxu0 0.0
    %1495 = vmatprep.subr.mxu0 0.0
    %1496 = vmatpush1.xpose.msra.mxu0 0.0
    %1497 = vmatprep.subr.mxu0 0.0
    %1498 = vmatpush1.xpose.msra.mxu0 %v1465
    %1499 = vmatprep.subr.mxu0 0.0
    %1500 = vmatpush2.xpose.msra.mxu0 0.0
    %1501 = vmatprep.subr.mxu0 0.0
    %1502 = vmatpush2.xpose.msra.mxu0 0.0
    %1503 = vmatprep.subr.mxu0 0.0
    %1504 = vmatpush2.xpose.msra.mxu0 0.0
    %1505 = vmatprep.subr.mxu0 0.0
    %1506 = vmatpush2.xpose.msra.mxu0 0.0
    %1507 = vmatprep.subr.mxu0 0.0
    %1508 = vmatpush2.xpose.msra.mxu0 0.0
    %1509 = vmatprep.subr.mxu0 0.0
    %1510 = vmatpush2.xpose.msra.mxu0 0.0
    %1511 = vmatprep.subr.mxu0 0.0
    %1512 = vmatpush2.xpose.msra.mxu0 0.0
    %1513 = vmatprep.subr.mxu0 0.0
    %1514 = vmatpush2.xpose.msra.mxu0 0.0
    %1515 = vmatprep.subr.mxu0 0.0
    %1516 = vmatpush2.xpose.msra.mxu0 0.0
    %1517 = vmatprep.subr.mxu0 0.0
    %1518 = vmatpush2.xpose.msra.mxu0 0.0
    %1519 = vmatprep.subr.mxu0 0.0
    %1520 = vmatpush2.xpose.msra.mxu0 0.0
    %1521 = vmatprep.subr.mxu0 0.0
    %1522 = vmatpush2.xpose.msra.mxu0 0.0
    %1523 = vmatprep.subr.mxu0 0.0
    %1524 = vmatpush2.xpose.msra.mxu0 0.0
    %1525 = vmatprep.subr.mxu0 0.0
    %1526 = vmatpush2.xpose.msra.mxu0 0.0
    %1527 = vmatprep.subr.mxu0 0.0
    %1528 = vmatpush2.xpose.msra.mxu0 0.0
    %1529 = vmatprep.subr.mxu0 0.0
    %1530 = vmatpush2.xpose.msra.mxu0 0.0
    %1531 = vmatprep.mubr.f32.mxu0 0.0
    %1532 = vmatmul.mubr.f32.gmra.mxu0 %v1465
    %v1533 = vpop.f32.mrf.mxu0
    %v1534 = vadd.f32 %v951, %v1533
    %v1535 = vpop.f32.mrf.mxu0
    %1536 = vdwg.mxu0
    %v1537 = vsel %vm952, %v1023, -inf
    %1538 = vmax.xlane.f32.xlu0 %v1537
    %v1539 = vpop.xlane.xlu0 %1538
    %v1540 = vsel %vm952, %v1096, -inf
    %1541 = vmax.xlane.f32.xlu0 %v1540
    %v1542 = vpop.xlane.xlu0 %1541
    %v1543 = vsel %vm952, %v1169, -inf
    %1544 = vmax.xlane.f32.xlu0 %v1543
    %v1545 = vpop.xlane.xlu0 %1544
    %v1546 = vsel %vm952, %v1242, -inf
    %1547 = vmax.xlane.f32.xlu0 %v1546
    %v1548 = vpop.xlane.xlu0 %1547
    %v1549 = vsel %vm952, %v1315, -inf
    %1550 = vmax.xlane.f32.xlu0 %v1549
    %v1551 = vpop.xlane.xlu0 %1550
    %v1552 = vsel %vm952, %v1388, -inf
    %1553 = vmax.xlane.f32.xlu0 %v1552
    %v1554 = vpop.xlane.xlu0 %1553
    %v1555 = vsel %vm952, %v1461, -inf
    %1556 = vmax.xlane.f32.xlu0 %v1555
    %v1557 = vpop.xlane.xlu0 %1556
    %v1558 = vsel %vm952, %v1534, -inf
    %1559 = vmax.xlane.f32.xlu0 %v1558
    %v1560 = vpop.xlane.xlu0 %1559
    %v1561 = vsub.f32 %v1023, %v1539
    %v1562 = vsub.f32 %v1096, %v1542
    %v1563 = vsub.f32 %v1169, %v1545
    %v1564 = vsub.f32 %v1242, %v1548
    %v1565 = vsub.f32 %v1315, %v1551
    %v1566 = vsub.f32 %v1388, %v1554
    %v1567 = vsub.f32 %v1461, %v1557
    %v1568 = vsub.f32 %v1534, %v1560
    %v1569 = vmul.f32 %v1561, 1.442695
    %v1570 = vpow.pop %v1569
    %v1571 = vmul.f32 %v1562, 1.442695
    %v1572 = vpow.pop %v1571
    %v1573 = vmul.f32 %v1563, 1.442695
    %v1574 = vpow.pop %v1573
    %v1575 = vmul.f32 %v1564, 1.442695
    %v1576 = vpow.pop %v1575
    %v1577 = vmul.f32 %v1565, 1.442695
    %v1578 = vpow.pop %v1577
    %v1579 = vmul.f32 %v1566, 1.442695
    %v1580 = vpow.pop %v1579
    %v1581 = vmul.f32 %v1567, 1.442695
    %v1582 = vpow.pop %v1581
    %v1583 = vmul.f32 %v1568, 1.442695
    %v1584 = vpow.pop %v1583
    %v1585 = vsel %vm952, %v1570, 0.0
    %1586 = vadd.xlane.f32.xlu0 %v1585
    %v1587 = vpop.xlane.xlu0 %1586
    %v1588 = vsel %vm952, %v1572, 0.0
    %1589 = vadd.xlane.f32.xlu0 %v1588
    %v1590 = vpop.xlane.xlu0 %1589
    %v1591 = vsel %vm952, %v1574, 0.0
    %1592 = vadd.xlane.f32.xlu0 %v1591
    %v1593 = vpop.xlane.xlu0 %1592
    %v1594 = vsel %vm952, %v1576, 0.0
    %1595 = vadd.xlane.f32.xlu0 %v1594
    %v1596 = vpop.xlane.xlu0 %1595
    %v1597 = vsel %vm952, %v1578, 0.0
    %1598 = vadd.xlane.f32.xlu0 %v1597
    %v1599 = vpop.xlane.xlu0 %1598
    %v1600 = vsel %vm952, %v1580, 0.0
    %1601 = vadd.xlane.f32.xlu0 %v1600
    %v1602 = vpop.xlane.xlu0 %1601
    %v1603 = vsel %vm952, %v1582, 0.0
    %1604 = vadd.xlane.f32.xlu0 %v1603
    %v1605 = vpop.xlane.xlu0 %1604
    %v1606 = vsel %vm952, %v1584, 0.0
    %1607 = vadd.xlane.f32.xlu0 %v1606
    %v1608 = vpop.xlane.xlu0 %1607
    %v1609 = vrcp.pop %v1587
    %v1610 = vrcp.pop %v1590
    %v1611 = vrcp.pop %v1593
    %v1612 = vrcp.pop %v1596
    %v1613 = vrcp.pop %v1599
    %v1614 = vrcp.pop %v1602
    %v1615 = vrcp.pop %v1605
    %v1616 = vrcp.pop %v1608
    %v1617 = vmul.f32 %v1570, %v1609
    %v1618 = vmul.f32 %v1572, %v1610
    %v1619 = vmul.f32 %v1574, %v1611
    %v1620 = vmul.f32 %v1576, %v1612
    %v1621 = vmul.f32 %v1578, %v1613
    %v1622 = vmul.f32 %v1580, %v1614
    %v1623 = vmul.f32 %v1582, %v1615
    %v1624 = vmul.f32 %v1584, %v1616
    %v1626 = vsel %vm952, %v1617, 0
    %1628 = vmatprep.subr.mxu0 0.0
    %1629 = vmatpush1.msra.mxu0 0.0
    %1630 = vmatprep.subr.mxu0 0.0
    %1631 = vmatpush1.msra.mxu0 0.0
    %1632 = vmatprep.subr.mxu0 0.0
    %1633 = vmatpush1.msra.mxu0 0.0
    %1634 = vmatprep.subr.mxu0 0.0
    %1635 = vmatpush1.msra.mxu0 0.0
    %1636 = vmatprep.subr.mxu0 0.0
    %1637 = vmatpush1.msra.mxu0 0.0
    %1638 = vmatprep.subr.mxu0 0.0
    %1639 = vmatpush1.msra.mxu0 0.0
    %1640 = vmatprep.subr.mxu0 0.0
    %1641 = vmatpush1.msra.mxu0 0.0
    %1642 = vmatprep.subr.mxu0 0.0
    %1643 = vmatpush1.msra.mxu0 0.0
    %1644 = vmatprep.subr.mxu0 0.0
    %1645 = vmatpush1.msra.mxu0 0.0
    %1646 = vmatprep.subr.mxu0 0.0
    %1647 = vmatpush1.msra.mxu0 0.0
    %1648 = vmatprep.subr.mxu0 0.0
    %1649 = vmatpush1.msra.mxu0 0.0
    %1650 = vmatprep.subr.mxu0 0.0
    %1651 = vmatpush1.msra.mxu0 0.0
    %1652 = vmatprep.subr.mxu0 0.0
    %1653 = vmatpush1.msra.mxu0 0.0
    %1654 = vmatprep.subr.mxu0 0.0
    %1655 = vmatpush1.msra.mxu0 0.0
    %1656 = vmatprep.subr.mxu0 0.0
    %1657 = vmatpush1.msra.mxu0 0.0
    %1658 = vmatprep.subr.mxu0 0.0
    %1659 = vmatpush1.msra.mxu0 %v582
    %1660 = vmatprep.subr.mxu0 0.0
    %1661 = vmatpush2.msra.mxu0 0.0
    %1662 = vmatprep.subr.mxu0 0.0
    %1663 = vmatpush2.msra.mxu0 0.0
    %1664 = vmatprep.subr.mxu0 0.0
    %1665 = vmatpush2.msra.mxu0 0.0
    %1666 = vmatprep.subr.mxu0 0.0
    %1667 = vmatpush2.msra.mxu0 0.0
    %1668 = vmatprep.subr.mxu0 0.0
    %1669 = vmatpush2.msra.mxu0 0.0
    %1670 = vmatprep.subr.mxu0 0.0
    %1671 = vmatpush2.msra.mxu0 0.0
    %1672 = vmatprep.subr.mxu0 0.0
    %1673 = vmatpush2.msra.mxu0 0.0
    %1674 = vmatprep.subr.mxu0 0.0
    %1675 = vmatpush2.msra.mxu0 0.0
    %1676 = vmatprep.subr.mxu0 0.0
    %1677 = vmatpush2.msra.mxu0 0.0
    %1678 = vmatprep.subr.mxu0 0.0
    %1679 = vmatpush2.msra.mxu0 0.0
    %1680 = vmatprep.subr.mxu0 0.0
    %1681 = vmatpush2.msra.mxu0 0.0
    %1682 = vmatprep.subr.mxu0 0.0
    %1683 = vmatpush2.msra.mxu0 0.0
    %1684 = vmatprep.subr.mxu0 0.0
    %1685 = vmatpush2.msra.mxu0 0.0
    %1686 = vmatprep.subr.mxu0 0.0
    %1687 = vmatpush2.msra.mxu0 0.0
    %1688 = vmatprep.subr.mxu0 0.0
    %1689 = vmatpush2.msra.mxu0 0.0
    %1690 = vmatprep.subr.mxu0 0.0
    %1691 = vmatpush2.msra.mxu0 0.0
    %1692 = vmatprep.mubr.f32.mxu0 0.0
    %1693 = vmatmul.mubr.f32.gmra.mxu0 %v1626
    %v1694 = vpop.f32.mrf.mxu0
    %v1695 = vadd.f32 0.0, %v1694
    %v1696 = vpop.f32.mrf.mxu0
    %1697 = vdwg.mxu0
    %v1699 = vsel %vm952, %v1618, 0
    %1701 = vmatprep.subr.mxu0 0.0
    %1702 = vmatpush1.msra.mxu0 0.0
    %1703 = vmatprep.subr.mxu0 0.0
    %1704 = vmatpush1.msra.mxu0 0.0
    %1705 = vmatprep.subr.mxu0 0.0
    %1706 = vmatpush1.msra.mxu0 0.0
    %1707 = vmatprep.subr.mxu0 0.0
    %1708 = vmatpush1.msra.mxu0 0.0
    %1709 = vmatprep.subr.mxu0 0.0
    %1710 = vmatpush1.msra.mxu0 0.0
    %1711 = vmatprep.subr.mxu0 0.0
    %1712 = vmatpush1.msra.mxu0 0.0
    %1713 = vmatprep.subr.mxu0 0.0
    %1714 = vmatpush1.msra.mxu0 0.0
    %1715 = vmatprep.subr.mxu0 0.0
    %1716 = vmatpush1.msra.mxu0 0.0
    %1717 = vmatprep.subr.mxu0 0.0
    %1718 = vmatpush1.msra.mxu0 0.0
    %1719 = vmatprep.subr.mxu0 0.0
    %1720 = vmatpush1.msra.mxu0 0.0
    %1721 = vmatprep.subr.mxu0 0.0
    %1722 = vmatpush1.msra.mxu0 0.0
    %1723 = vmatprep.subr.mxu0 0.0
    %1724 = vmatpush1.msra.mxu0 0.0
    %1725 = vmatprep.subr.mxu0 0.0
    %1726 = vmatpush1.msra.mxu0 0.0
    %1727 = vmatprep.subr.mxu0 0.0
    %1728 = vmatpush1.msra.mxu0 0.0
    %1729 = vmatprep.subr.mxu0 0.0
    %1730 = vmatpush1.msra.mxu0 0.0
    %1731 = vmatprep.subr.mxu0 0.0
    %1732 = vmatpush1.msra.mxu0 %v634
    %1733 = vmatprep.subr.mxu0 0.0
    %1734 = vmatpush2.msra.mxu0 0.0
    %1735 = vmatprep.subr.mxu0 0.0
    %1736 = vmatpush2.msra.mxu0 0.0
    %1737 = vmatprep.subr.mxu0 0.0
    %1738 = vmatpush2.msra.mxu0 0.0
    %1739 = vmatprep.subr.mxu0 0.0
    %1740 = vmatpush2.msra.mxu0 0.0
    %1741 = vmatprep.subr.mxu0 0.0
    %1742 = vmatpush2.msra.mxu0 0.0
    %1743 = vmatprep.subr.mxu0 0.0
    %1744 = vmatpush2.msra.mxu0 0.0
    %1745 = vmatprep.subr.mxu0 0.0
    %1746 = vmatpush2.msra.mxu0 0.0
    %1747 = vmatprep.subr.mxu0 0.0
    %1748 = vmatpush2.msra.mxu0 0.0
    %1749 = vmatprep.subr.mxu0 0.0
    %1750 = vmatpush2.msra.mxu0 0.0
    %1751 = vmatprep.subr.mxu0 0.0
    %1752 = vmatpush2.msra.mxu0 0.0
    %1753 = vmatprep.subr.mxu0 0.0
    %1754 = vmatpush2.msra.mxu0 0.0
    %1755 = vmatprep.subr.mxu0 0.0
    %1756 = vmatpush2.msra.mxu0 0.0
    %1757 = vmatprep.subr.mxu0 0.0
    %1758 = vmatpush2.msra.mxu0 0.0
    %1759 = vmatprep.subr.mxu0 0.0
    %1760 = vmatpush2.msra.mxu0 0.0
    %1761 = vmatprep.subr.mxu0 0.0
    %1762 = vmatpush2.msra.mxu0 0.0
    %1763 = vmatprep.subr.mxu0 0.0
    %1764 = vmatpush2.msra.mxu0 0.0
    %1765 = vmatprep.mubr.f32.mxu0 0.0
    %1766 = vmatmul.mubr.f32.gmra.mxu0 %v1699
    %v1767 = vpop.f32.mrf.mxu0
    %v1768 = vadd.f32 0.0, %v1767
    %v1769 = vpop.f32.mrf.mxu0
    %1770 = vdwg.mxu0
    %v1772 = vsel %vm952, %v1619, 0
    %1774 = vmatprep.subr.mxu0 0.0
    %1775 = vmatpush1.msra.mxu0 0.0
    %1776 = vmatprep.subr.mxu0 0.0
    %1777 = vmatpush1.msra.mxu0 0.0
    %1778 = vmatprep.subr.mxu0 0.0
    %1779 = vmatpush1.msra.mxu0 0.0
    %1780 = vmatprep.subr.mxu0 0.0
    %1781 = vmatpush1.msra.mxu0 0.0
    %1782 = vmatprep.subr.mxu0 0.0
    %1783 = vmatpush1.msra.mxu0 0.0
    %1784 = vmatprep.subr.mxu0 0.0
    %1785 = vmatpush1.msra.mxu0 0.0
    %1786 = vmatprep.subr.mxu0 0.0
    %1787 = vmatpush1.msra.mxu0 0.0
    %1788 = vmatprep.subr.mxu0 0.0
    %1789 = vmatpush1.msra.mxu0 0.0
    %1790 = vmatprep.subr.mxu0 0.0
    %1791 = vmatpush1.msra.mxu0 0.0
    %1792 = vmatprep.subr.mxu0 0.0
    %1793 = vmatpush1.msra.mxu0 0.0
    %1794 = vmatprep.subr.mxu0 0.0
    %1795 = vmatpush1.msra.mxu0 0.0
    %1796 = vmatprep.subr.mxu0 0.0
    %1797 = vmatpush1.msra.mxu0 0.0
    %1798 = vmatprep.subr.mxu0 0.0
    %1799 = vmatpush1.msra.mxu0 0.0
    %1800 = vmatprep.subr.mxu0 0.0
    %1801 = vmatpush1.msra.mxu0 0.0
    %1802 = vmatprep.subr.mxu0 0.0
    %1803 = vmatpush1.msra.mxu0 0.0
    %1804 = vmatprep.subr.mxu0 0.0
    %1805 = vmatpush1.msra.mxu0 %v686
    %1806 = vmatprep.subr.mxu0 0.0
    %1807 = vmatpush2.msra.mxu0 0.0
    %1808 = vmatprep.subr.mxu0 0.0
    %1809 = vmatpush2.msra.mxu0 0.0
    %1810 = vmatprep.subr.mxu0 0.0
    %1811 = vmatpush2.msra.mxu0 0.0
    %1812 = vmatprep.subr.mxu0 0.0
    %1813 = vmatpush2.msra.mxu0 0.0
    %1814 = vmatprep.subr.mxu0 0.0
    %1815 = vmatpush2.msra.mxu0 0.0
    %1816 = vmatprep.subr.mxu0 0.0
    %1817 = vmatpush2.msra.mxu0 0.0
    %1818 = vmatprep.subr.mxu0 0.0
    %1819 = vmatpush2.msra.mxu0 0.0
    %1820 = vmatprep.subr.mxu0 0.0
    %1821 = vmatpush2.msra.mxu0 0.0
    %1822 = vmatprep.subr.mxu0 0.0
    %1823 = vmatpush2.msra.mxu0 0.0
    %1824 = vmatprep.subr.mxu0 0.0
    %1825 = vmatpush2.msra.mxu0 0.0
    %1826 = vmatprep.subr.mxu0 0.0
    %1827 = vmatpush2.msra.mxu0 0.0
    %1828 = vmatprep.subr.mxu0 0.0
    %1829 = vmatpush2.msra.mxu0 0.0
    %1830 = vmatprep.subr.mxu0 0.0
    %1831 = vmatpush2.msra.mxu0 0.0
    %1832 = vmatprep.subr.mxu0 0.0
    %1833 = vmatpush2.msra.mxu0 0.0
    %1834 = vmatprep.subr.mxu0 0.0
    %1835 = vmatpush2.msra.mxu0 0.0
    %1836 = vmatprep.subr.mxu0 0.0
    %1837 = vmatpush2.msra.mxu0 0.0
    %1838 = vmatprep.mubr.f32.mxu0 0.0
    %1839 = vmatmul.mubr.f32.gmra.mxu0 %v1772
    %v1840 = vpop.f32.mrf.mxu0
    %v1841 = vadd.f32 0.0, %v1840
    %v1842 = vpop.f32.mrf.mxu0
    %1843 = vdwg.mxu0
    %v1845 = vsel %vm952, %v1620, 0
    %1847 = vmatprep.subr.mxu0 0.0
    %1848 = vmatpush1.msra.mxu0 0.0
    %1849 = vmatprep.subr.mxu0 0.0
    %1850 = vmatpush1.msra.mxu0 0.0
    %1851 = vmatprep.subr.mxu0 0.0
    %1852 = vmatpush1.msra.mxu0 0.0
    %1853 = vmatprep.subr.mxu0 0.0
    %1854 = vmatpush1.msra.mxu0 0.0
    %1855 = vmatprep.subr.mxu0 0.0
    %1856 = vmatpush1.msra.mxu0 0.0
    %1857 = vmatprep.subr.mxu0 0.0
    %1858 = vmatpush1.msra.mxu0 0.0
    %1859 = vmatprep.subr.mxu0 0.0
    %1860 = vmatpush1.msra.mxu0 0.0
    %1861 = vmatprep.subr.mxu0 0.0
    %1862 = vmatpush1.msra.mxu0 0.0
    %1863 = vmatprep.subr.mxu0 0.0
    %1864 = vmatpush1.msra.mxu0 0.0
    %1865 = vmatprep.subr.mxu0 0.0
    %1866 = vmatpush1.msra.mxu0 0.0
    %1867 = vmatprep.subr.mxu0 0.0
    %1868 = vmatpush1.msra.mxu0 0.0
    %1869 = vmatprep.subr.mxu0 0.0
    %1870 = vmatpush1.msra.mxu0 0.0
    %1871 = vmatprep.subr.mxu0 0.0
    %1872 = vmatpush1.msra.mxu0 0.0
    %1873 = vmatprep.subr.mxu0 0.0
    %1874 = vmatpush1.msra.mxu0 0.0
    %1875 = vmatprep.subr.mxu0 0.0
    %1876 = vmatpush1.msra.mxu0 0.0
    %1877 = vmatprep.subr.mxu0 0.0
    %1878 = vmatpush1.msra.mxu0 %v738
    %1879 = vmatprep.subr.mxu0 0.0
    %1880 = vmatpush2.msra.mxu0 0.0
    %1881 = vmatprep.subr.mxu0 0.0
    %1882 = vmatpush2.msra.mxu0 0.0
    %1883 = vmatprep.subr.mxu0 0.0
    %1884 = vmatpush2.msra.mxu0 0.0
    %1885 = vmatprep.subr.mxu0 0.0
    %1886 = vmatpush2.msra.mxu0 0.0
    %1887 = vmatprep.subr.mxu0 0.0
    %1888 = vmatpush2.msra.mxu0 0.0
    %1889 = vmatprep.subr.mxu0 0.0
    %1890 = vmatpush2.msra.mxu0 0.0
    %1891 = vmatprep.subr.mxu0 0.0
    %1892 = vmatpush2.msra.mxu0 0.0
    %1893 = vmatprep.subr.mxu0 0.0
    %1894 = vmatpush2.msra.mxu0 0.0
    %1895 = vmatprep.subr.mxu0 0.0
    %1896 = vmatpush2.msra.mxu0 0.0
    %1897 = vmatprep.subr.mxu0 0.0
    %1898 = vmatpush2.msra.mxu0 0.0
    %1899 = vmatprep.subr.mxu0 0.0
    %1900 = vmatpush2.msra.mxu0 0.0
    %1901 = vmatprep.subr.mxu0 0.0
    %1902 = vmatpush2.msra.mxu0 0.0
    %1903 = vmatprep.subr.mxu0 0.0
    %1904 = vmatpush2.msra.mxu0 0.0
    %1905 = vmatprep.subr.mxu0 0.0
    %1906 = vmatpush2.msra.mxu0 0.0
    %1907 = vmatprep.subr.mxu0 0.0
    %1908 = vmatpush2.msra.mxu0 0.0
    %1909 = vmatprep.subr.mxu0 0.0
    %1910 = vmatpush2.msra.mxu0 0.0
    %1911 = vmatprep.mubr.f32.mxu0 0.0
    %1912 = vmatmul.mubr.f32.gmra.mxu0 %v1845
    %v1913 = vpop.f32.mrf.mxu0
    %v1914 = vadd.f32 0.0, %v1913
    %v1915 = vpop.f32.mrf.mxu0
    %1916 = vdwg.mxu0
    %v1918 = vsel %vm952, %v1621, 0
    %1920 = vmatprep.subr.mxu0 0.0
    %1921 = vmatpush1.msra.mxu0 0.0
    %1922 = vmatprep.subr.mxu0 0.0
    %1923 = vmatpush1.msra.mxu0 0.0
    %1924 = vmatprep.subr.mxu0 0.0
    %1925 = vmatpush1.msra.mxu0 0.0
    %1926 = vmatprep.subr.mxu0 0.0
    %1927 = vmatpush1.msra.mxu0 0.0
    %1928 = vmatprep.subr.mxu0 0.0
    %1929 = vmatpush1.msra.mxu0 0.0
    %1930 = vmatprep.subr.mxu0 0.0
    %1931 = vmatpush1.msra.mxu0 0.0
    %1932 = vmatprep.subr.mxu0 0.0
    %1933 = vmatpush1.msra.mxu0 0.0
    %1934 = vmatprep.subr.mxu0 0.0
    %1935 = vmatpush1.msra.mxu0 0.0
    %1936 = vmatprep.subr.mxu0 0.0
    %1937 = vmatpush1.msra.mxu0 0.0
    %1938 = vmatprep.subr.mxu0 0.0
    %1939 = vmatpush1.msra.mxu0 0.0
    %1940 = vmatprep.subr.mxu0 0.0
    %1941 = vmatpush1.msra.mxu0 0.0
    %1942 = vmatprep.subr.mxu0 0.0
    %1943 = vmatpush1.msra.mxu0 0.0
    %1944 = vmatprep.subr.mxu0 0.0
    %1945 = vmatpush1.msra.mxu0 0.0
    %1946 = vmatprep.subr.mxu0 0.0
    %1947 = vmatpush1.msra.mxu0 0.0
    %1948 = vmatprep.subr.mxu0 0.0
    %1949 = vmatpush1.msra.mxu0 0.0
    %1950 = vmatprep.subr.mxu0 0.0
    %1951 = vmatpush1.msra.mxu0 %v790
    %1952 = vmatprep.subr.mxu0 0.0
    %1953 = vmatpush2.msra.mxu0 0.0
    %1954 = vmatprep.subr.mxu0 0.0
    %1955 = vmatpush2.msra.mxu0 0.0
    %1956 = vmatprep.subr.mxu0 0.0
    %1957 = vmatpush2.msra.mxu0 0.0
    %1958 = vmatprep.subr.mxu0 0.0
    %1959 = vmatpush2.msra.mxu0 0.0
    %1960 = vmatprep.subr.mxu0 0.0
    %1961 = vmatpush2.msra.mxu0 0.0
    %1962 = vmatprep.subr.mxu0 0.0
    %1963 = vmatpush2.msra.mxu0 0.0
    %1964 = vmatprep.subr.mxu0 0.0
    %1965 = vmatpush2.msra.mxu0 0.0
    %1966 = vmatprep.subr.mxu0 0.0
    %1967 = vmatpush2.msra.mxu0 0.0
    %1968 = vmatprep.subr.mxu0 0.0
    %1969 = vmatpush2.msra.mxu0 0.0
    %1970 = vmatprep.subr.mxu0 0.0
    %1971 = vmatpush2.msra.mxu0 0.0
    %1972 = vmatprep.subr.mxu0 0.0
    %1973 = vmatpush2.msra.mxu0 0.0
    %1974 = vmatprep.subr.mxu0 0.0
    %1975 = vmatpush2.msra.mxu0 0.0
    %1976 = vmatprep.subr.mxu0 0.0
    %1977 = vmatpush2.msra.mxu0 0.0
    %1978 = vmatprep.subr.mxu0 0.0
    %1979 = vmatpush2.msra.mxu0 0.0
    %1980 = vmatprep.subr.mxu0 0.0
    %1981 = vmatpush2.msra.mxu0 0.0
    %1982 = vmatprep.subr.mxu0 0.0
    %1983 = vmatpush2.msra.mxu0 0.0
    %1984 = vmatprep.mubr.f32.mxu0 0.0
    %1985 = vmatmul.mubr.f32.gmra.mxu0 %v1918
    %v1986 = vpop.f32.mrf.mxu0
    %v1987 = vadd.f32 0.0, %v1986
    %v1988 = vpop.f32.mrf.mxu0
    %1989 = vdwg.mxu0
    %v1991 = vsel %vm952, %v1622, 0
    %1993 = vmatprep.subr.mxu0 0.0
    %1994 = vmatpush1.msra.mxu0 0.0
    %1995 = vmatprep.subr.mxu0 0.0
    %1996 = vmatpush1.msra.mxu0 0.0
    %1997 = vmatprep.subr.mxu0 0.0
    %1998 = vmatpush1.msra.mxu0 0.0
    %1999 = vmatprep.subr.mxu0 0.0
    %2000 = vmatpush1.msra.mxu0 0.0
    %2001 = vmatprep.subr.mxu0 0.0
    %2002 = vmatpush1.msra.mxu0 0.0
    %2003 = vmatprep.subr.mxu0 0.0
    %2004 = vmatpush1.msra.mxu0 0.0
    %2005 = vmatprep.subr.mxu0 0.0
    %2006 = vmatpush1.msra.mxu0 0.0
    %2007 = vmatprep.subr.mxu0 0.0
    %2008 = vmatpush1.msra.mxu0 0.0
    %2009 = vmatprep.subr.mxu0 0.0
    %2010 = vmatpush1.msra.mxu0 0.0
    %2011 = vmatprep.subr.mxu0 0.0
    %2012 = vmatpush1.msra.mxu0 0.0
    %2013 = vmatprep.subr.mxu0 0.0
    %2014 = vmatpush1.msra.mxu0 0.0
    %2015 = vmatprep.subr.mxu0 0.0
    %2016 = vmatpush1.msra.mxu0 0.0
    %2017 = vmatprep.subr.mxu0 0.0
    %2018 = vmatpush1.msra.mxu0 0.0
    %2019 = vmatprep.subr.mxu0 0.0
    %2020 = vmatpush1.msra.mxu0 0.0
    %2021 = vmatprep.subr.mxu0 0.0
    %2022 = vmatpush1.msra.mxu0 0.0
    %2023 = vmatprep.subr.mxu0 0.0
    %2024 = vmatpush1.msra.mxu0 %v842
    %2025 = vmatprep.subr.mxu0 0.0
    %2026 = vmatpush2.msra.mxu0 0.0
    %2027 = vmatprep.subr.mxu0 0.0
    %2028 = vmatpush2.msra.mxu0 0.0
    %2029 = vmatprep.subr.mxu0 0.0
    %2030 = vmatpush2.msra.mxu0 0.0
    %2031 = vmatprep.subr.mxu0 0.0
    %2032 = vmatpush2.msra.mxu0 0.0
    %2033 = vmatprep.subr.mxu0 0.0
    %2034 = vmatpush2.msra.mxu0 0.0
    %2035 = vmatprep.subr.mxu0 0.0
    %2036 = vmatpush2.msra.mxu0 0.0
    %2037 = vmatprep.subr.mxu0 0.0
    %2038 = vmatpush2.msra.mxu0 0.0
    %2039 = vmatprep.subr.mxu0 0.0
    %2040 = vmatpush2.msra.mxu0 0.0
    %2041 = vmatprep.subr.mxu0 0.0
    %2042 = vmatpush2.msra.mxu0 0.0
    %2043 = vmatprep.subr.mxu0 0.0
    %2044 = vmatpush2.msra.mxu0 0.0
    %2045 = vmatprep.subr.mxu0 0.0
    %2046 = vmatpush2.msra.mxu0 0.0
    %2047 = vmatprep.subr.mxu0 0.0
    %2048 = vmatpush2.msra.mxu0 0.0
    %2049 = vmatprep.subr.mxu0 0.0
    %2050 = vmatpush2.msra.mxu0 0.0
    %2051 = vmatprep.subr.mxu0 0.0
    %2052 = vmatpush2.msra.mxu0 0.0
    %2053 = vmatprep.subr.mxu0 0.0
    %2054 = vmatpush2.msra.mxu0 0.0
    %2055 = vmatprep.subr.mxu0 0.0
    %2056 = vmatpush2.msra.mxu0 0.0
    %2057 = vmatprep.mubr.f32.mxu0 0.0
    %2058 = vmatmul.mubr.f32.gmra.mxu0 %v1991
    %v2059 = vpop.f32.mrf.mxu0
    %v2060 = vadd.f32 0.0, %v2059
    %v2061 = vpop.f32.mrf.mxu0
    %2062 = vdwg.mxu0
    %v2064 = vsel %vm952, %v1623, 0
    %2066 = vmatprep.subr.mxu0 0.0
    %2067 = vmatpush1.msra.mxu0 0.0
    %2068 = vmatprep.subr.mxu0 0.0
    %2069 = vmatpush1.msra.mxu0 0.0
    %2070 = vmatprep.subr.mxu0 0.0
    %2071 = vmatpush1.msra.mxu0 0.0
    %2072 = vmatprep.subr.mxu0 0.0
    %2073 = vmatpush1.msra.mxu0 0.0
    %2074 = vmatprep.subr.mxu0 0.0
    %2075 = vmatpush1.msra.mxu0 0.0
    %2076 = vmatprep.subr.mxu0 0.0
    %2077 = vmatpush1.msra.mxu0 0.0
    %2078 = vmatprep.subr.mxu0 0.0
    %2079 = vmatpush1.msra.mxu0 0.0
    %2080 = vmatprep.subr.mxu0 0.0
    %2081 = vmatpush1.msra.mxu0 0.0
    %2082 = vmatprep.subr.mxu0 0.0
    %2083 = vmatpush1.msra.mxu0 0.0
    %2084 = vmatprep.subr.mxu0 0.0
    %2085 = vmatpush1.msra.mxu0 0.0
    %2086 = vmatprep.subr.mxu0 0.0
    %2087 = vmatpush1.msra.mxu0 0.0
    %2088 = vmatprep.subr.mxu0 0.0
    %2089 = vmatpush1.msra.mxu0 0.0
    %2090 = vmatprep.subr.mxu0 0.0
    %2091 = vmatpush1.msra.mxu0 0.0
    %2092 = vmatprep.subr.mxu0 0.0
    %2093 = vmatpush1.msra.mxu0 0.0
    %2094 = vmatprep.subr.mxu0 0.0
    %2095 = vmatpush1.msra.mxu0 0.0
    %2096 = vmatprep.subr.mxu0 0.0
    %2097 = vmatpush1.msra.mxu0 %v894
    %2098 = vmatprep.subr.mxu0 0.0
    %2099 = vmatpush2.msra.mxu0 0.0
    %2100 = vmatprep.subr.mxu0 0.0
    %2101 = vmatpush2.msra.mxu0 0.0
    %2102 = vmatprep.subr.mxu0 0.0
    %2103 = vmatpush2.msra.mxu0 0.0
    %2104 = vmatprep.subr.mxu0 0.0
    %2105 = vmatpush2.msra.mxu0 0.0
    %2106 = vmatprep.subr.mxu0 0.0
    %2107 = vmatpush2.msra.mxu0 0.0
    %2108 = vmatprep.subr.mxu0 0.0
    %2109 = vmatpush2.msra.mxu0 0.0
    %2110 = vmatprep.subr.mxu0 0.0
    %2111 = vmatpush2.msra.mxu0 0.0
    %2112 = vmatprep.subr.mxu0 0.0
    %2113 = vmatpush2.msra.mxu0 0.0
    %2114 = vmatprep.subr.mxu0 0.0
    %2115 = vmatpush2.msra.mxu0 0.0
    %2116 = vmatprep.subr.mxu0 0.0
    %2117 = vmatpush2.msra.mxu0 0.0
    %2118 = vmatprep.subr.mxu0 0.0
    %2119 = vmatpush2.msra.mxu0 0.0
    %2120 = vmatprep.subr.mxu0 0.0
    %2121 = vmatpush2.msra.mxu0 0.0
    %2122 = vmatprep.subr.mxu0 0.0
    %2123 = vmatpush2.msra.mxu0 0.0
    %2124 = vmatprep.subr.mxu0 0.0
    %2125 = vmatpush2.msra.mxu0 0.0
    %2126 = vmatprep.subr.mxu0 0.0
    %2127 = vmatpush2.msra.mxu0 0.0
    %2128 = vmatprep.subr.mxu0 0.0
    %2129 = vmatpush2.msra.mxu0 0.0
    %2130 = vmatprep.mubr.f32.mxu0 0.0
    %2131 = vmatmul.mubr.f32.gmra.mxu0 %v2064
    %v2132 = vpop.f32.mrf.mxu0
    %v2133 = vadd.f32 0.0, %v2132
    %v2134 = vpop.f32.mrf.mxu0
    %2135 = vdwg.mxu0
    %v2137 = vsel %vm952, %v1624, 0
    %2139 = vmatprep.subr.mxu0 0.0
    %2140 = vmatpush1.msra.mxu0 0.0
    %2141 = vmatprep.subr.mxu0 0.0
    %2142 = vmatpush1.msra.mxu0 0.0
    %2143 = vmatprep.subr.mxu0 0.0
    %2144 = vmatpush1.msra.mxu0 0.0
    %2145 = vmatprep.subr.mxu0 0.0
    %2146 = vmatpush1.msra.mxu0 0.0
    %2147 = vmatprep.subr.mxu0 0.0
    %2148 = vmatpush1.msra.mxu0 0.0
    %2149 = vmatprep.subr.mxu0 0.0
    %2150 = vmatpush1.msra.mxu0 0.0
    %2151 = vmatprep.subr.mxu0 0.0
    %2152 = vmatpush1.msra.mxu0 0.0
    %2153 = vmatprep.subr.mxu0 0.0
    %2154 = vmatpush1.msra.mxu0 0.0
    %2155 = vmatprep.subr.mxu0 0.0
    %2156 = vmatpush1.msra.mxu0 0.0
    %2157 = vmatprep.subr.mxu0 0.0
    %2158 = vmatpush1.msra.mxu0 0.0
    %2159 = vmatprep.subr.mxu0 0.0
    %2160 = vmatpush1.msra.mxu0 0.0
    %2161 = vmatprep.subr.mxu0 0.0
    %2162 = vmatpush1.msra.mxu0 0.0
    %2163 = vmatprep.subr.mxu0 0.0
    %2164 = vmatpush1.msra.mxu0 0.0
    %2165 = vmatprep.subr.mxu0 0.0
    %2166 = vmatpush1.msra.mxu0 0.0
    %2167 = vmatprep.subr.mxu0 0.0
    %2168 = vmatpush1.msra.mxu0 0.0
    %2169 = vmatprep.subr.mxu0 0.0
    %2170 = vmatpush1.msra.mxu0 %v946
    %2171 = vmatprep.subr.mxu0 0.0
    %2172 = vmatpush2.msra.mxu0 0.0
    %2173 = vmatprep.subr.mxu0 0.0
    %2174 = vmatpush2.msra.mxu0 0.0
    %2175 = vmatprep.subr.mxu0 0.0
    %2176 = vmatpush2.msra.mxu0 0.0
    %2177 = vmatprep.subr.mxu0 0.0
    %2178 = vmatpush2.msra.mxu0 0.0
    %2179 = vmatprep.subr.mxu0 0.0
    %2180 = vmatpush2.msra.mxu0 0.0
    %2181 = vmatprep.subr.mxu0 0.0
    %2182 = vmatpush2.msra.mxu0 0.0
    %2183 = vmatprep.subr.mxu0 0.0
    %2184 = vmatpush2.msra.mxu0 0.0
    %2185 = vmatprep.subr.mxu0 0.0
    %2186 = vmatpush2.msra.mxu0 0.0
    %2187 = vmatprep.subr.mxu0 0.0
    %2188 = vmatpush2.msra.mxu0 0.0
    %2189 = vmatprep.subr.mxu0 0.0
    %2190 = vmatpush2.msra.mxu0 0.0
    %2191 = vmatprep.subr.mxu0 0.0
    %2192 = vmatpush2.msra.mxu0 0.0
    %2193 = vmatprep.subr.mxu0 0.0
    %2194 = vmatpush2.msra.mxu0 0.0
    %2195 = vmatprep.subr.mxu0 0.0
    %2196 = vmatpush2.msra.mxu0 0.0
    %2197 = vmatprep.subr.mxu0 0.0
    %2198 = vmatpush2.msra.mxu0 0.0
    %2199 = vmatprep.subr.mxu0 0.0
    %2200 = vmatpush2.msra.mxu0 0.0
    %2201 = vmatprep.subr.mxu0 0.0
    %2202 = vmatpush2.msra.mxu0 0.0
    %2203 = vmatprep.mubr.f32.mxu0 0.0
    %2204 = vmatmul.mubr.f32.gmra.mxu0 %v2137
    %v2205 = vpop.f32.mrf.mxu0
    %v2206 = vadd.f32 0.0, %v2205
    %v2207 = vpop.f32.mrf.mxu0
    %2208 = vdwg.mxu0
    %v2209 = vsel %vm74, %v1695, 0.0
    %v2210 = vsel %vm74, %v1768, 0.0
    %v2211 = vadd.f32 %v2209, %v2210
    %v2212 = vsel %vm74, %v1841, 0.0
    %v2213 = vadd.f32 %v2211, %v2212
    %v2214 = vsel %vm74, %v1914, 0.0
    %v2215 = vadd.f32 %v2213, %v2214
    %v2216 = vsel %vm74, %v1987, 0.0
    %v2217 = vsel %vm74, %v2060, 0.0
    %v2218 = vadd.f32 %v2216, %v2217
    %v2219 = vsel %vm74, %v2133, 0.0
    %v2220 = vadd.f32 %v2218, %v2219
    %v2221 = vsel %vm74, %v2206, 0.0
    %v2222 = vadd.f32 %v2220, %v2221
    %v2223 = vld [vmem:[%s4] sm:$0x1]
    %v2225 = vlaneseq
    %v2226 = vshrl.u32 %v2225, 7
    %v2227 = vsub.s32 0, %v2226
    %v2228 = vrot.slane %v2223, %v2227
    %v2230 = vadd.f32 %v2215, %v2228
    %v2231 = vadd.f32 %v2222, %v2228
    %2232 = vst.msk [vmem:[#allocation2] sm:$0xff] %vm74, %v2230
    %2233 = vst.msk [vmem:[#allocation2 + $0x8] sm:$0xff] %vm74, %v2231
    // Predicated region
    $region22: #{multi_head_attention.1} parent=1 // pred_check
      _
    $region23: #{multi_head_attention.1} parent=1 // pred_check_branch
      %2235 = sbr.rel (0) target = $region25
    $region24: #{multi_head_attention.1} parent=1 // pred_region
      %s2237 = ssub.s32 256, 256
      %2238 = vsyncadd [#allocation3], %s2237
      %s2239 = sshll.u32 [#allocation2], 4
      %s2240 = int_to_ptr.vmem [resolvable:$true] %s2239
      %2245 = dma.vmem_to_hbm [thread:$0]  %s2240, 256, %s5, [#allocation3], 128, 128, 8
    $region25: #{multi_head_attention.1} parent=1 // pred_fallthru
      _
    // Predicated region
    $region26: #{multi_head_attention.1} parent=1 // pred_check
      _
    $region27: #{multi_head_attention.1} parent=1 // pred_check_branch
      %2247 = sbr.rel (0) target = $region29
    $region28: #{multi_head_attention.1} parent=1 // pred_region
      %2248 = dma.done [#allocation3], 256
    $region29: #{multi_head_attention.1} parent=1 // pred_fallthru
      _
    %2249 = vsyncpa [#allocation3], 1

</llo_original>
